<compile_context>
chip_gen: v7x
topology: tpu7x:2x2x1
jax: 0.10.0
libtpu: 0.0.40
codegen_flags: <defaults>
</compile_context>

<pallas_src>
import functools

import jax
import jax.numpy as jnp
from jax.experimental import pallas as pl
from jax.experimental.pallas import tpu as pltpu


def _round_up(x, m):
    return (x + m - 1) // m * m


def _slab_layout(input_size, hidden_size, n_actions):
    """Row/lane layout of the packed parameter slab (tile-aligned sections)."""
    I, H, A = input_size, hidden_size, n_actions
    L = _round_up(max(4 * H, A + 1), 128)      # lane width (lane-dense, >=128)
    r_wih = 0                                  # W_ih^T rows [0, I)
    r_whh = _round_up(I, 8)                    # W_hh^T rows [r_whh, r_whh+H)
    r_bg = r_whh + _round_up(H, 8)             # fused gate bias row
    r_wh = r_bg + 8                            # fused head weight rows [r_wh, +H)
    r_bh = r_wh + _round_up(H, 8)              # fused head bias row
    P = r_bh + 8
    return L, (r_wih, r_whh, r_bg, r_wh, r_bh), P


def init_raw_params(key, input_size, hidden_size, n_actions):
    """Deterministic synthetic init matching the nn.Module parameter shapes."""
    ks = jax.random.split(key, 8)
    k = 1.0 / jnp.sqrt(hidden_size)
    H = hidden_size
    return {
        # nn.LSTMCell: weight_ih [4H, I], weight_hh [4H, H], bias_ih/bias_hh [4H]
        "w_ih": jax.random.uniform(ks[0], (4 * H, input_size), jnp.float32, -k, k),
        "w_hh": jax.random.uniform(ks[1], (4 * H, H), jnp.float32, -k, k),
        "b_ih": jax.random.uniform(ks[2], (4 * H,), jnp.float32, -k, k),
        "b_hh": jax.random.uniform(ks[3], (4 * H,), jnp.float32, -k, k),
        # nn.Linear actor: [A, H], [A]; critic: [1, H], [1]
        "w_actor": jax.random.uniform(ks[4], (n_actions, H), jnp.float32, -k, k),
        "b_actor": jax.random.uniform(ks[5], (n_actions,), jnp.float32, -k, k),
        "w_critic": jax.random.uniform(ks[6], (1, H), jnp.float32, -k, k),
        "b_critic": jax.random.uniform(ks[7], (1,), jnp.float32, -k, k),
    }


def pack_params(raw, input_size, hidden_size, n_actions):
    """Pack every parameter into one lane-dense f32 slab [P, L] (single DMA)."""
    I, H, A = input_size, hidden_size, n_actions
    L, (r_wih, r_whh, r_bg, r_wh, r_bh), P = _slab_layout(I, H, A)

    slab = jnp.zeros((P, L), jnp.float32)
    slab = slab.at[r_wih:r_wih + I, 0:4 * H].set(raw["w_ih"].T)        # [I, 4H]
    slab = slab.at[r_whh:r_whh + H, 0:4 * H].set(raw["w_hh"].T)        # [H, 4H]
    slab = slab.at[r_bg, 0:4 * H].set(raw["b_ih"] + raw["b_hh"])
    # fused actor|critic head: [H, A+1], zero padded to L lanes
    w_head = jnp.concatenate([raw["w_actor"].T, raw["w_critic"].T], axis=1)
    slab = slab.at[r_wh:r_wh + H, 0:A + 1].set(w_head)
    slab = slab.at[r_bh, 0:A + 1].set(
        jnp.concatenate([raw["b_actor"], raw["b_critic"]]))
    # TODO(synk): bf16 weight storage would halve the (already tiny) one-time
    # slab DMA but conflicts with the tight f32 correctness check; kept f32.
    return slab


@functools.partial(jax.jit, static_argnames=("n_actions", "batch_block"))
def lstm_agent_rollout(xs, h0, c0, slab, *, n_actions, batch_block=8):
    """T-step LSTMAgent rollout in a single Pallas kernel.

    xs: [T, B, I]  observations per step
    h0, c0: [B, H] initial recurrent state (module keeps zeros)
    slab: packed parameter slab from pack_params()
    Returns (logits [T, B, A], values [T, B, 1], h_T [B, H], c_T [B, H]).
    """
    T, B, I = xs.shape
    H = h0.shape[-1]
    A = n_actions
    P, L = slab.shape
    L_chk, (r_wih, r_whh, r_bg, r_wh, r_bh), P_chk = _slab_layout(I, H, A)
    assert (P, L) == (P_chk, L_chk), "slab layout mismatch"
    Bt = min(batch_block, B)
    assert B % Bt == 0, "batch must be divisible by batch_block"

    def kernel(x_ref, h0_ref, c0_ref, slab_ref,     # inputs
               head_out, h_out, c_out,              # outputs
               pre_sc, hs_sc):                      # VMEM scratch
        # ---- Phase 1: hoisted input projection for ALL T steps (one MXU pass),
        # with the fused gate bias folded in once.
        w_ih = slab_ref[r_wih:r_wih + I, :]                      # [I, L]
        b_g = slab_ref[r_bg:r_bg + 1, :]                         # [1, L]
        x_flat = x_ref[...].reshape(T * Bt, I)                   # layout-free reshape
        pre = jnp.dot(x_flat, w_ih, preferred_element_type=jnp.float32) + b_g
        pre_sc[...] = pre.reshape(T, Bt, L)

        # ---- Phase 2: serial recurrence.  Per step: one [Bt,H]x[H,4H] dot
        # plus elementwise; everything loop-invariant is hoisted.
        w_hh = slab_ref[r_whh:r_whh + H, :]                      # [H, L]

        def body(t, carry):
            h, c = carry
            gates = (jnp.dot(h, w_hh, preferred_element_type=jnp.float32)
                     + pre_sc[t])                                # [Bt, L]
            sig = jax.nn.sigmoid(gates)                          # whole-vreg EUP
            th = jnp.tanh(gates)                                 # whole-vreg EUP
            i_g = sig[:, 0 * H:1 * H]
            f_g = sig[:, 1 * H:2 * H]
            g_g = th[:, 2 * H:3 * H]
            o_g = sig[:, 3 * H:4 * H]
            c_new = f_g * c + i_g * g_g
            h_new = o_g * jnp.tanh(c_new)
            hs_sc[t] = h_new                                     # stash for head
            return (h_new, c_new)

        h_fin, c_fin = jax.lax.fori_loop(
            0, T, body, (h0_ref[...], c0_ref[...]), unroll=True)
        h_out[...] = h_fin
        c_out[...] = c_fin

        # ---- Phase 3: deferred fused actor|critic head for all T steps:
        # one [T*Bt, H] x [H, L] MXU pass + one lane-dense store.
        w_head = slab_ref[r_wh:r_wh + H, :]                      # [H, L]
        b_head = slab_ref[r_bh:r_bh + 1, :]                      # [1, L]
        hs_flat = hs_sc[...].reshape(T * Bt, H)
        head = jnp.dot(hs_flat, w_head,
                       preferred_element_type=jnp.float32) + b_head
        head_out[...] = head.reshape(T, Bt, L)

    head, h_fin, c_fin = pl.pallas_call(
        kernel,
        out_shape=(
            jax.ShapeDtypeStruct((T, B, L), jnp.float32),   # fused head slab
            jax.ShapeDtypeStruct((B, H), jnp.float32),      # final h
            jax.ShapeDtypeStruct((B, H), jnp.float32),      # final c
        ),
        grid=(B // Bt,),
        in_specs=[
            pl.BlockSpec((T, Bt, I), lambda b: (0, b, 0)),   # whole rollout of x
            pl.BlockSpec((Bt, H), lambda b: (b, 0)),         # h0
            pl.BlockSpec((Bt, H), lambda b: (b, 0)),         # c0
            pl.BlockSpec((P, L), lambda b: (0, 0)),          # params: resident
        ],
        out_specs=(
            pl.BlockSpec((T, Bt, L), lambda b: (0, b, 0)),   # all heads, one store
            pl.BlockSpec((Bt, H), lambda b: (b, 0)),         # h_T
            pl.BlockSpec((Bt, H), lambda b: (b, 0)),         # c_T
        ),
        scratch_shapes=[
            pltpu.VMEM((T, Bt, L), jnp.float32),   # precomputed x@W_ih^T + bias
            pltpu.VMEM((T, Bt, H), jnp.float32),   # h history for deferred head
        ],
        compiler_params=pltpu.CompilerParams(
            dimension_semantics=("parallel",)),
    )(xs, h0, c0, slab)

    logits = head[:, :, :A]          # Categorical(logits=...) per step
    values = head[:, :, A:A + 1]     # critic value per step
    return logits, values, h_fin, c_fin


def reference_rollout(xs, h0, c0, raw):
    """Pure-JAX reference with PyTorch LSTMCell semantics (unfused math)."""
    w_ih_t, w_hh_t = raw["w_ih"].T, raw["w_hh"].T
    b = (raw["b_ih"] + raw["b_hh"])[None, :]
    w_a_t, b_a = raw["w_actor"].T, raw["b_actor"][None, :]
    w_c_t, b_c = raw["w_critic"].T, raw["b_critic"][None, :]
    H = h0.shape[-1]

    def step(carry, x):
        h, c = carry
        gates = x @ w_ih_t + h @ w_hh_t + b
        i_g = jax.nn.sigmoid(gates[:, :H])
        f_g = jax.nn.sigmoid(gates[:, H:2 * H])
        g_g = jnp.tanh(gates[:, 2 * H:3 * H])
        o_g = jax.nn.sigmoid(gates[:, 3 * H:])
        c_new = f_g * c + i_g * g_g
        h_new = o_g * jnp.tanh(c_new)
        return (h_new, c_new), (h_new @ w_a_t + b_a, h_new @ w_c_t + b_c)

    (h_T, c_T), (logits, values) = jax.lax.scan(step, (h0, c0), xs)
    return logits, values, h_T, c_T


if __name__ == "__main__":
    input_size, hidden_size, n_actions = 16, 32, 4
    T, B = 8, 16         # 8-step rollout, 16 envs = 2 full-sublane batch blocks
                         # (one per TensorCore on v7x via the parallel grid axis)

    key = jax.random.PRNGKey(0)
    kx, kp = jax.random.split(key)
    raw = init_raw_params(kp, input_size, hidden_size, n_actions)
    slab = pack_params(raw, input_size, hidden_size, n_actions)

    xs = jax.random.normal(kx, (T, B, input_size), jnp.float32)
    h0 = jnp.zeros((B, hidden_size), jnp.float32)   # self.hn (per env row)
    c0 = jnp.zeros((B, hidden_size), jnp.float32)   # self.cn (per env row)

    logits, values, hT, cT = lstm_agent_rollout(
        xs, h0, c0, slab, n_actions=n_actions, batch_block=8)
    jax.block_until_ready((logits, values, hT, cT))

    # Correctness vs. pure-JAX reference (PyTorch LSTMCell semantics).
    # Tolerance covers MXU default-precision f32 matmuls on both paths.
    rl, rv, rh, rc = reference_rollout(xs, h0, c0, raw)
    assert jnp.allclose(logits, rl, atol=2e-3, rtol=2e-3), "logits mismatch"
    assert jnp.allclose(values, rv, atol=2e-3, rtol=2e-3), "value mismatch"
    assert jnp.allclose(hT, rh, atol=2e-3, rtol=2e-3), "h mismatch"
    assert jnp.allclose(cT, rc, atol=2e-3, rtol=2e-3), "c mismatch"

    # TODO(synk): Categorical sampling / log_prob and optimizer steps are glue
    # outside the kernel; the kernel returns the logits the distribution wraps.
    print("KERNEL_OK")
</pallas_src>

<mosaic_0001>
module attributes {stable_mosaic.version = 11 : i64} {
  func.func @kernel(%arg0: i32, %arg1: memref<8x8x16xf32, #tpu.memory_space<vmem>>, %arg2: memref<8x32xf32, #tpu.memory_space<vmem>>, %arg3: memref<8x32xf32, #tpu.memory_space<vmem>>, %arg4: memref<96x128xf32, #tpu.memory_space<vmem>>, %arg5: memref<8x8x128xf32, #tpu.memory_space<vmem>>, %arg6: memref<8x32xf32, #tpu.memory_space<vmem>>, %arg7: memref<8x32xf32, #tpu.memory_space<vmem>>, %arg8: memref<8x8x128xf32, #tpu.memory_space<vmem>>, %arg9: memref<8x8x32xf32, #tpu.memory_space<vmem>>) attributes {dimension_semantics = [#tpu.dimension_semantics<parallel>], iteration_bounds = array<i64: 2>, scalar_prefetch = 0 : i64, scratch_operands = 2 : i64, tpu.core_type = #tpu.core_type<tc>, window_params = [{transform_indices = @transform_0, window_bounds = array<i64: 8, 8, 16>}, {transform_indices = @transform_1, window_bounds = array<i64: 8, 32>}, {transform_indices = @transform_2, window_bounds = array<i64: 8, 32>}, {pipeline_mode = #tpu.pipeline_mode<synchronous>, transform_indices = @transform_3, window_bounds = array<i64: 96, 128>}, {transform_indices = @transform_4, window_bounds = array<i64: 8, 8, 128>}, {transform_indices = @transform_5, window_bounds = array<i64: 8, 32>}, {transform_indices = @transform_6, window_bounds = array<i64: 8, 32>}]} {
    %c0 = arith.constant 0 : index
    %c0_0 = arith.constant 0 : index
    %0 = vector.load %arg4[%c0, %c0_0] : memref<96x128xf32, #tpu.memory_space<vmem>>, vector<16x128xf32>
    %c48 = arith.constant 48 : index
    %c0_1 = arith.constant 0 : index
    %1 = vector.load %arg4[%c48, %c0_1] : memref<96x128xf32, #tpu.memory_space<vmem>>, vector<1x128xf32>
    %c0_2 = arith.constant 0 : index
    %c0_3 = arith.constant 0 : index
    %c0_4 = arith.constant 0 : index
    %2 = vector.load %arg1[%c0_2, %c0_3, %c0_4] : memref<8x8x16xf32, #tpu.memory_space<vmem>>, vector<8x8x16xf32>
    %3 = vector.shape_cast %2 : vector<8x8x16xf32> to vector<64x16xf32>
    %cst = arith.constant dense<0.000000e+00> : vector<64x128xf32>
    %4 = tpu.matmul %3, %0, %cst {dimension_numbers = #tpu.dot_dimension_numbers<[1], [0], [0], [1], [0, 0, 1, 1], [], []>} : vector<64x16xf32>, vector<16x128xf32>, vector<64x128xf32> -> vector<64x128xf32>
    %5 = vector.broadcast %1 : vector<1x128xf32> to vector<64x128xf32>
    %6 = arith.addf %4, %5 : vector<64x128xf32>
    %7 = vector.shape_cast %6 : vector<64x128xf32> to vector<8x8x128xf32>
    %c0_5 = arith.constant 0 : index
    %c0_6 = arith.constant 0 : index
    %c0_7 = arith.constant 0 : index
    %8 = vector.load %arg8[%c0_5, %c0_6, %c0_7] : memref<8x8x128xf32, #tpu.memory_space<vmem>>, vector<8x8x128xf32>
    tpu.vector_store %arg8[%c0_5, %c0_6, %c0_7], %7 {strides = array<i32>} : memref<8x8x128xf32, #tpu.memory_space<vmem>>, vector<8x8x128xf32>,
    %c16 = arith.constant 16 : index
    %c0_8 = arith.constant 0 : index
    %9 = vector.load %arg4[%c16, %c0_8] : memref<96x128xf32, #tpu.memory_space<vmem>>, vector<32x128xf32>
    %c0_9 = arith.constant 0 : index
    %c0_10 = arith.constant 0 : index
    %10 = vector.load %arg2[%c0_9, %c0_10] : memref<8x32xf32, #tpu.memory_space<vmem>>, vector<8x32xf32>
    %c0_11 = arith.constant 0 : index
    %c0_12 = arith.constant 0 : index
    %11 = vector.load %arg3[%c0_11, %c0_12] : memref<8x32xf32, #tpu.memory_space<vmem>>, vector<8x32xf32>
    %c0_i32 = arith.constant 0 : i32
    %cst_13 = arith.constant dense<0.000000e+00> : vector<8x128xf32>
    %12 = tpu.matmul %10, %9, %cst_13 {dimension_numbers = #tpu.dot_dimension_numbers<[1], [0], [0], [1], [0, 0, 1, 1], [], []>} : vector<8x32xf32>, vector<32x128xf32>, vector<8x128xf32> -> vector<8x128xf32>
    %13 = arith.index_cast %c0_i32 : i32 to index
    %c0_14 = arith.constant 0 : index
    %c0_15 = arith.constant 0 : index
    %14 = vector.load %arg8[%13, %c0_14, %c0_15] : memref<8x8x128xf32, #tpu.memory_space<vmem>>, vector<1x8x128xf32>
    %15 = vector.shape_cast %14 : vector<1x8x128xf32> to vector<8x128xf32>
    %16 = arith.addf %12, %15 : vector<8x128xf32>
    %17 = arith.negf %16 : vector<8x128xf32>
    %18 = math.exp %17 : vector<8x128xf32>
    %cst_16 = arith.constant 1.000000e+00 : f32
    %19 = vector.broadcast %cst_16 : f32 to vector<8x128xf32>
    %20 = arith.addf %19, %18 : vector<8x128xf32>
    %21 = arith.divf %19, %20 : vector<8x128xf32>
    %22 = math.tanh %16 : vector<8x128xf32>
    %23 = vector.extract_strided_slice %21 {offsets = [0, 0], sizes = [8, 32], strides = [1, 1]} : vector<8x128xf32> to vector<8x32xf32>
    %24 = vector.extract_strided_slice %21 {offsets = [0, 32], sizes = [8, 32], strides = [1, 1]} : vector<8x128xf32> to vector<8x32xf32>
    %25 = vector.extract_strided_slice %22 {offsets = [0, 64], sizes = [8, 32], strides = [1, 1]} : vector<8x128xf32> to vector<8x32xf32>
    %26 = vector.extract_strided_slice %21 {offsets = [0, 96], sizes = [8, 32], strides = [1, 1]} : vector<8x128xf32> to vector<8x32xf32>
    %27 = arith.mulf %24, %11 : vector<8x32xf32>
    %28 = arith.mulf %23, %25 : vector<8x32xf32>
    %29 = arith.addf %27, %28 : vector<8x32xf32>
    %30 = math.tanh %29 : vector<8x32xf32>
    %31 = arith.mulf %26, %30 : vector<8x32xf32>
    %32 = arith.index_cast %c0_i32 : i32 to index
    %c0_17 = arith.constant 0 : index
    %c0_18 = arith.constant 0 : index
    %33 = vector.load %arg9[%32, %c0_17, %c0_18] : memref<8x8x32xf32, #tpu.memory_space<vmem>>, vector<1x8x32xf32>
    %34 = vector.shape_cast %33 : vector<1x8x32xf32> to vector<8x32xf32>
    %35 = vector.shape_cast %31 : vector<8x32xf32> to vector<1x8x32xf32>
    tpu.vector_store %arg9[%32, %c0_17, %c0_18], %35 {strides = array<i32>} : memref<8x8x32xf32, #tpu.memory_space<vmem>>, vector<1x8x32xf32>,
    %c1_i32 = arith.constant 1 : i32
    %cst_19 = arith.constant dense<0.000000e+00> : vector<8x128xf32>
    %36 = tpu.matmul %31, %9, %cst_19 {dimension_numbers = #tpu.dot_dimension_numbers<[1], [0], [0], [1], [0, 0, 1, 1], [], []>} : vector<8x32xf32>, vector<32x128xf32>, vector<8x128xf32> -> vector<8x128xf32>
    %37 = arith.index_cast %c1_i32 : i32 to index
    %c0_20 = arith.constant 0 : index
    %c0_21 = arith.constant 0 : index
    %38 = vector.load %arg8[%37, %c0_20, %c0_21] : memref<8x8x128xf32, #tpu.memory_space<vmem>>, vector<1x8x128xf32>
    %39 = vector.shape_cast %38 : vector<1x8x128xf32> to vector<8x128xf32>
    %40 = arith.addf %36, %39 : vector<8x128xf32>
    %41 = arith.negf %40 : vector<8x128xf32>
    %42 = math.exp %41 : vector<8x128xf32>
    %cst_22 = arith.constant 1.000000e+00 : f32
    %43 = vector.broadcast %cst_22 : f32 to vector<8x128xf32>
    %44 = arith.addf %43, %42 : vector<8x128xf32>
    %45 = arith.divf %43, %44 : vector<8x128xf32>
    %46 = math.tanh %40 : vector<8x128xf32>
    %47 = vector.extract_strided_slice %45 {offsets = [0, 0], sizes = [8, 32], strides = [1, 1]} : vector<8x128xf32> to vector<8x32xf32>
    %48 = vector.extract_strided_slice %45 {offsets = [0, 32], sizes = [8, 32], strides = [1, 1]} : vector<8x128xf32> to vector<8x32xf32>
    %49 = vector.extract_strided_slice %46 {offsets = [0, 64], sizes = [8, 32], strides = [1, 1]} : vector<8x128xf32> to vector<8x32xf32>
    %50 = vector.extract_strided_slice %45 {offsets = [0, 96], sizes = [8, 32], strides = [1, 1]} : vector<8x128xf32> to vector<8x32xf32>
    %51 = arith.mulf %48, %29 : vector<8x32xf32>
    %52 = arith.mulf %47, %49 : vector<8x32xf32>
    %53 = arith.addf %51, %52 : vector<8x32xf32>
    %54 = math.tanh %53 : vector<8x32xf32>
    %55 = arith.mulf %50, %54 : vector<8x32xf32>
    %56 = arith.index_cast %c1_i32 : i32 to index
    %c0_23 = arith.constant 0 : index
    %c0_24 = arith.constant 0 : index
    %57 = vector.load %arg9[%56, %c0_23, %c0_24] : memref<8x8x32xf32, #tpu.memory_space<vmem>>, vector<1x8x32xf32>
    %58 = vector.shape_cast %57 : vector<1x8x32xf32> to vector<8x32xf32>
    %59 = vector.shape_cast %55 : vector<8x32xf32> to vector<1x8x32xf32>
    tpu.vector_store %arg9[%56, %c0_23, %c0_24], %59 {strides = array<i32>} : memref<8x8x32xf32, #tpu.memory_space<vmem>>, vector<1x8x32xf32>,
    %c2_i32 = arith.constant 2 : i32
    %cst_25 = arith.constant dense<0.000000e+00> : vector<8x128xf32>
    %60 = tpu.matmul %55, %9, %cst_25 {dimension_numbers = #tpu.dot_dimension_numbers<[1], [0], [0], [1], [0, 0, 1, 1], [], []>} : vector<8x32xf32>, vector<32x128xf32>, vector<8x128xf32> -> vector<8x128xf32>
    %61 = arith.index_cast %c2_i32 : i32 to index
    %c0_26 = arith.constant 0 : index
    %c0_27 = arith.constant 0 : index
    %62 = vector.load %arg8[%61, %c0_26, %c0_27] : memref<8x8x128xf32, #tpu.memory_space<vmem>>, vector<1x8x128xf32>
    %63 = vector.shape_cast %62 : vector<1x8x128xf32> to vector<8x128xf32>
    %64 = arith.addf %60, %63 : vector<8x128xf32>
    %65 = arith.negf %64 : vector<8x128xf32>
    %66 = math.exp %65 : vector<8x128xf32>
    %cst_28 = arith.constant 1.000000e+00 : f32
    %67 = vector.broadcast %cst_28 : f32 to vector<8x128xf32>
    %68 = arith.addf %67, %66 : vector<8x128xf32>
    %69 = arith.divf %67, %68 : vector<8x128xf32>
    %70 = math.tanh %64 : vector<8x128xf32>
    %71 = vector.extract_strided_slice %69 {offsets = [0, 0], sizes = [8, 32], strides = [1, 1]} : vector<8x128xf32> to vector<8x32xf32>
    %72 = vector.extract_strided_slice %69 {offsets = [0, 32], sizes = [8, 32], strides = [1, 1]} : vector<8x128xf32> to vector<8x32xf32>
    %73 = vector.extract_strided_slice %70 {offsets = [0, 64], sizes = [8, 32], strides = [1, 1]} : vector<8x128xf32> to vector<8x32xf32>
    %74 = vector.extract_strided_slice %69 {offsets = [0, 96], sizes = [8, 32], strides = [1, 1]} : vector<8x128xf32> to vector<8x32xf32>
    %75 = arith.mulf %72, %53 : vector<8x32xf32>
    %76 = arith.mulf %71, %73 : vector<8x32xf32>
    %77 = arith.addf %75, %76 : vector<8x32xf32>
    %78 = math.tanh %77 : vector<8x32xf32>
    %79 = arith.mulf %74, %78 : vector<8x32xf32>
    %80 = arith.index_cast %c2_i32 : i32 to index
    %c0_29 = arith.constant 0 : index
    %c0_30 = arith.constant 0 : index
    %81 = vector.load %arg9[%80, %c0_29, %c0_30] : memref<8x8x32xf32, #tpu.memory_space<vmem>>, vector<1x8x32xf32>
    %82 = vector.shape_cast %81 : vector<1x8x32xf32> to vector<8x32xf32>
    %83 = vector.shape_cast %79 : vector<8x32xf32> to vector<1x8x32xf32>
    tpu.vector_store %arg9[%80, %c0_29, %c0_30], %83 {strides = array<i32>} : memref<8x8x32xf32, #tpu.memory_space<vmem>>, vector<1x8x32xf32>,
    %c3_i32 = arith.constant 3 : i32
    %cst_31 = arith.constant dense<0.000000e+00> : vector<8x128xf32>
    %84 = tpu.matmul %79, %9, %cst_31 {dimension_numbers = #tpu.dot_dimension_numbers<[1], [0], [0], [1], [0, 0, 1, 1], [], []>} : vector<8x32xf32>, vector<32x128xf32>, vector<8x128xf32> -> vector<8x128xf32>
    %85 = arith.index_cast %c3_i32 : i32 to index
    %c0_32 = arith.constant 0 : index
    %c0_33 = arith.constant 0 : index
    %86 = vector.load %arg8[%85, %c0_32, %c0_33] : memref<8x8x128xf32, #tpu.memory_space<vmem>>, vector<1x8x128xf32>
    %87 = vector.shape_cast %86 : vector<1x8x128xf32> to vector<8x128xf32>
    %88 = arith.addf %84, %87 : vector<8x128xf32>
    %89 = arith.negf %88 : vector<8x128xf32>
    %90 = math.exp %89 : vector<8x128xf32>
    %cst_34 = arith.constant 1.000000e+00 : f32
    %91 = vector.broadcast %cst_34 : f32 to vector<8x128xf32>
    %92 = arith.addf %91, %90 : vector<8x128xf32>
    %93 = arith.divf %91, %92 : vector<8x128xf32>
    %94 = math.tanh %88 : vector<8x128xf32>
    %95 = vector.extract_strided_slice %93 {offsets = [0, 0], sizes = [8, 32], strides = [1, 1]} : vector<8x128xf32> to vector<8x32xf32>
    %96 = vector.extract_strided_slice %93 {offsets = [0, 32], sizes = [8, 32], strides = [1, 1]} : vector<8x128xf32> to vector<8x32xf32>
    %97 = vector.extract_strided_slice %94 {offsets = [0, 64], sizes = [8, 32], strides = [1, 1]} : vector<8x128xf32> to vector<8x32xf32>
    %98 = vector.extract_strided_slice %93 {offsets = [0, 96], sizes = [8, 32], strides = [1, 1]} : vector<8x128xf32> to vector<8x32xf32>
    %99 = arith.mulf %96, %77 : vector<8x32xf32>
    %100 = arith.mulf %95, %97 : vector<8x32xf32>
    %101 = arith.addf %99, %100 : vector<8x32xf32>
    %102 = math.tanh %101 : vector<8x32xf32>
    %103 = arith.mulf %98, %102 : vector<8x32xf32>
    %104 = arith.index_cast %c3_i32 : i32 to index
    %c0_35 = arith.constant 0 : index
    %c0_36 = arith.constant 0 : index
    %105 = vector.load %arg9[%104, %c0_35, %c0_36] : memref<8x8x32xf32, #tpu.memory_space<vmem>>, vector<1x8x32xf32>
    %106 = vector.shape_cast %105 : vector<1x8x32xf32> to vector<8x32xf32>
    %107 = vector.shape_cast %103 : vector<8x32xf32> to vector<1x8x32xf32>
    tpu.vector_store %arg9[%104, %c0_35, %c0_36], %107 {strides = array<i32>} : memref<8x8x32xf32, #tpu.memory_space<vmem>>, vector<1x8x32xf32>,
    %c4_i32 = arith.constant 4 : i32
    %cst_37 = arith.constant dense<0.000000e+00> : vector<8x128xf32>
    %108 = tpu.matmul %103, %9, %cst_37 {dimension_numbers = #tpu.dot_dimension_numbers<[1], [0], [0], [1], [0, 0, 1, 1], [], []>} : vector<8x32xf32>, vector<32x128xf32>, vector<8x128xf32> -> vector<8x128xf32>
    %109 = arith.index_cast %c4_i32 : i32 to index
    %c0_38 = arith.constant 0 : index
    %c0_39 = arith.constant 0 : index
    %110 = vector.load %arg8[%109, %c0_38, %c0_39] : memref<8x8x128xf32, #tpu.memory_space<vmem>>, vector<1x8x128xf32>
    %111 = vector.shape_cast %110 : vector<1x8x128xf32> to vector<8x128xf32>
    %112 = arith.addf %108, %111 : vector<8x128xf32>
    %113 = arith.negf %112 : vector<8x128xf32>
    %114 = math.exp %113 : vector<8x128xf32>
    %cst_40 = arith.constant 1.000000e+00 : f32
    %115 = vector.broadcast %cst_40 : f32 to vector<8x128xf32>
    %116 = arith.addf %115, %114 : vector<8x128xf32>
    %117 = arith.divf %115, %116 : vector<8x128xf32>
    %118 = math.tanh %112 : vector<8x128xf32>
    %119 = vector.extract_strided_slice %117 {offsets = [0, 0], sizes = [8, 32], strides = [1, 1]} : vector<8x128xf32> to vector<8x32xf32>
    %120 = vector.extract_strided_slice %117 {offsets = [0, 32], sizes = [8, 32], strides = [1, 1]} : vector<8x128xf32> to vector<8x32xf32>
    %121 = vector.extract_strided_slice %118 {offsets = [0, 64], sizes = [8, 32], strides = [1, 1]} : vector<8x128xf32> to vector<8x32xf32>
    %122 = vector.extract_strided_slice %117 {offsets = [0, 96], sizes = [8, 32], strides = [1, 1]} : vector<8x128xf32> to vector<8x32xf32>
    %123 = arith.mulf %120, %101 : vector<8x32xf32>
    %124 = arith.mulf %119, %121 : vector<8x32xf32>
    %125 = arith.addf %123, %124 : vector<8x32xf32>
    %126 = math.tanh %125 : vector<8x32xf32>
    %127 = arith.mulf %122, %126 : vector<8x32xf32>
    %128 = arith.index_cast %c4_i32 : i32 to index
    %c0_41 = arith.constant 0 : index
    %c0_42 = arith.constant 0 : index
    %129 = vector.load %arg9[%128, %c0_41, %c0_42] : memref<8x8x32xf32, #tpu.memory_space<vmem>>, vector<1x8x32xf32>
    %130 = vector.shape_cast %129 : vector<1x8x32xf32> to vector<8x32xf32>
    %131 = vector.shape_cast %127 : vector<8x32xf32> to vector<1x8x32xf32>
    tpu.vector_store %arg9[%128, %c0_41, %c0_42], %131 {strides = array<i32>} : memref<8x8x32xf32, #tpu.memory_space<vmem>>, vector<1x8x32xf32>,
    %c5_i32 = arith.constant 5 : i32
    %cst_43 = arith.constant dense<0.000000e+00> : vector<8x128xf32>
    %132 = tpu.matmul %127, %9, %cst_43 {dimension_numbers = #tpu.dot_dimension_numbers<[1], [0], [0], [1], [0, 0, 1, 1], [], []>} : vector<8x32xf32>, vector<32x128xf32>, vector<8x128xf32> -> vector<8x128xf32>
    %133 = arith.index_cast %c5_i32 : i32 to index
    %c0_44 = arith.constant 0 : index
    %c0_45 = arith.constant 0 : index
    %134 = vector.load %arg8[%133, %c0_44, %c0_45] : memref<8x8x128xf32, #tpu.memory_space<vmem>>, vector<1x8x128xf32>
    %135 = vector.shape_cast %134 : vector<1x8x128xf32> to vector<8x128xf32>
    %136 = arith.addf %132, %135 : vector<8x128xf32>
    %137 = arith.negf %136 : vector<8x128xf32>
    %138 = math.exp %137 : vector<8x128xf32>
    %cst_46 = arith.constant 1.000000e+00 : f32
    %139 = vector.broadcast %cst_46 : f32 to vector<8x128xf32>
    %140 = arith.addf %139, %138 : vector<8x128xf32>
    %141 = arith.divf %139, %140 : vector<8x128xf32>
    %142 = math.tanh %136 : vector<8x128xf32>
    %143 = vector.extract_strided_slice %141 {offsets = [0, 0], sizes = [8, 32], strides = [1, 1]} : vector<8x128xf32> to vector<8x32xf32>
    %144 = vector.extract_strided_slice %141 {offsets = [0, 32], sizes = [8, 32], strides = [1, 1]} : vector<8x128xf32> to vector<8x32xf32>
    %145 = vector.extract_strided_slice %142 {offsets = [0, 64], sizes = [8, 32], strides = [1, 1]} : vector<8x128xf32> to vector<8x32xf32>
    %146 = vector.extract_strided_slice %141 {offsets = [0, 96], sizes = [8, 32], strides = [1, 1]} : vector<8x128xf32> to vector<8x32xf32>
    %147 = arith.mulf %144, %125 : vector<8x32xf32>
    %148 = arith.mulf %143, %145 : vector<8x32xf32>
    %149 = arith.addf %147, %148 : vector<8x32xf32>
    %150 = math.tanh %149 : vector<8x32xf32>
    %151 = arith.mulf %146, %150 : vector<8x32xf32>
    %152 = arith.index_cast %c5_i32 : i32 to index
    %c0_47 = arith.constant 0 : index
    %c0_48 = arith.constant 0 : index
    %153 = vector.load %arg9[%152, %c0_47, %c0_48] : memref<8x8x32xf32, #tpu.memory_space<vmem>>, vector<1x8x32xf32>
    %154 = vector.shape_cast %153 : vector<1x8x32xf32> to vector<8x32xf32>
    %155 = vector.shape_cast %151 : vector<8x32xf32> to vector<1x8x32xf32>
    tpu.vector_store %arg9[%152, %c0_47, %c0_48], %155 {strides = array<i32>} : memref<8x8x32xf32, #tpu.memory_space<vmem>>, vector<1x8x32xf32>,
    %c6_i32 = arith.constant 6 : i32
    %cst_49 = arith.constant dense<0.000000e+00> : vector<8x128xf32>
    %156 = tpu.matmul %151, %9, %cst_49 {dimension_numbers = #tpu.dot_dimension_numbers<[1], [0], [0], [1], [0, 0, 1, 1], [], []>} : vector<8x32xf32>, vector<32x128xf32>, vector<8x128xf32> -> vector<8x128xf32>
    %157 = arith.index_cast %c6_i32 : i32 to index
    %c0_50 = arith.constant 0 : index
    %c0_51 = arith.constant 0 : index
    %158 = vector.load %arg8[%157, %c0_50, %c0_51] : memref<8x8x128xf32, #tpu.memory_space<vmem>>, vector<1x8x128xf32>
    %159 = vector.shape_cast %158 : vector<1x8x128xf32> to vector<8x128xf32>
    %160 = arith.addf %156, %159 : vector<8x128xf32>
    %161 = arith.negf %160 : vector<8x128xf32>
    %162 = math.exp %161 : vector<8x128xf32>
    %cst_52 = arith.constant 1.000000e+00 : f32
    %163 = vector.broadcast %cst_52 : f32 to vector<8x128xf32>
    %164 = arith.addf %163, %162 : vector<8x128xf32>
    %165 = arith.divf %163, %164 : vector<8x128xf32>
    %166 = math.tanh %160 : vector<8x128xf32>
    %167 = vector.extract_strided_slice %165 {offsets = [0, 0], sizes = [8, 32], strides = [1, 1]} : vector<8x128xf32> to vector<8x32xf32>
    %168 = vector.extract_strided_slice %165 {offsets = [0, 32], sizes = [8, 32], strides = [1, 1]} : vector<8x128xf32> to vector<8x32xf32>
    %169 = vector.extract_strided_slice %166 {offsets = [0, 64], sizes = [8, 32], strides = [1, 1]} : vector<8x128xf32> to vector<8x32xf32>
    %170 = vector.extract_strided_slice %165 {offsets = [0, 96], sizes = [8, 32], strides = [1, 1]} : vector<8x128xf32> to vector<8x32xf32>
    %171 = arith.mulf %168, %149 : vector<8x32xf32>
    %172 = arith.mulf %167, %169 : vector<8x32xf32>
    %173 = arith.addf %171, %172 : vector<8x32xf32>
    %174 = math.tanh %173 : vector<8x32xf32>
    %175 = arith.mulf %170, %174 : vector<8x32xf32>
    %176 = arith.index_cast %c6_i32 : i32 to index
    %c0_53 = arith.constant 0 : index
    %c0_54 = arith.constant 0 : index
    %177 = vector.load %arg9[%176, %c0_53, %c0_54] : memref<8x8x32xf32, #tpu.memory_space<vmem>>, vector<1x8x32xf32>
    %178 = vector.shape_cast %177 : vector<1x8x32xf32> to vector<8x32xf32>
    %179 = vector.shape_cast %175 : vector<8x32xf32> to vector<1x8x32xf32>
    tpu.vector_store %arg9[%176, %c0_53, %c0_54], %179 {strides = array<i32>} : memref<8x8x32xf32, #tpu.memory_space<vmem>>, vector<1x8x32xf32>,
    %c7_i32 = arith.constant 7 : i32
    %cst_55 = arith.constant dense<0.000000e+00> : vector<8x128xf32>
    %180 = tpu.matmul %175, %9, %cst_55 {dimension_numbers = #tpu.dot_dimension_numbers<[1], [0], [0], [1], [0, 0, 1, 1], [], []>} : vector<8x32xf32>, vector<32x128xf32>, vector<8x128xf32> -> vector<8x128xf32>
    %181 = arith.index_cast %c7_i32 : i32 to index
    %c0_56 = arith.constant 0 : index
    %c0_57 = arith.constant 0 : index
    %182 = vector.load %arg8[%181, %c0_56, %c0_57] : memref<8x8x128xf32, #tpu.memory_space<vmem>>, vector<1x8x128xf32>
    %183 = vector.shape_cast %182 : vector<1x8x128xf32> to vector<8x128xf32>
    %184 = arith.addf %180, %183 : vector<8x128xf32>
    %185 = arith.negf %184 : vector<8x128xf32>
    %186 = math.exp %185 : vector<8x128xf32>
    %cst_58 = arith.constant 1.000000e+00 : f32
    %187 = vector.broadcast %cst_58 : f32 to vector<8x128xf32>
    %188 = arith.addf %187, %186 : vector<8x128xf32>
    %189 = arith.divf %187, %188 : vector<8x128xf32>
    %190 = math.tanh %184 : vector<8x128xf32>
    %191 = vector.extract_strided_slice %189 {offsets = [0, 0], sizes = [8, 32], strides = [1, 1]} : vector<8x128xf32> to vector<8x32xf32>
    %192 = vector.extract_strided_slice %189 {offsets = [0, 32], sizes = [8, 32], strides = [1, 1]} : vector<8x128xf32> to vector<8x32xf32>
    %193 = vector.extract_strided_slice %190 {offsets = [0, 64], sizes = [8, 32], strides = [1, 1]} : vector<8x128xf32> to vector<8x32xf32>
    %194 = vector.extract_strided_slice %189 {offsets = [0, 96], sizes = [8, 32], strides = [1, 1]} : vector<8x128xf32> to vector<8x32xf32>
    %195 = arith.mulf %192, %173 : vector<8x32xf32>
    %196 = arith.mulf %191, %193 : vector<8x32xf32>
    %197 = arith.addf %195, %196 : vector<8x32xf32>
    %198 = math.tanh %197 : vector<8x32xf32>
    %199 = arith.mulf %194, %198 : vector<8x32xf32>
    %200 = arith.index_cast %c7_i32 : i32 to index
    %c0_59 = arith.constant 0 : index
    %c0_60 = arith.constant 0 : index
    %201 = vector.load %arg9[%200, %c0_59, %c0_60] : memref<8x8x32xf32, #tpu.memory_space<vmem>>, vector<1x8x32xf32>
    %202 = vector.shape_cast %201 : vector<1x8x32xf32> to vector<8x32xf32>
    %203 = vector.shape_cast %199 : vector<8x32xf32> to vector<1x8x32xf32>
    tpu.vector_store %arg9[%200, %c0_59, %c0_60], %203 {strides = array<i32>} : memref<8x8x32xf32, #tpu.memory_space<vmem>>, vector<1x8x32xf32>,
    %c8_i32 = arith.constant 8 : i32
    %c0_61 = arith.constant 0 : index
    %c0_62 = arith.constant 0 : index
    %204 = vector.load %arg6[%c0_61, %c0_62] : memref<8x32xf32, #tpu.memory_space<vmem>>, vector<8x32xf32>
    tpu.vector_store %arg6[%c0_61, %c0_62], %199 {strides = array<i32>} : memref<8x32xf32, #tpu.memory_space<vmem>>, vector<8x32xf32>,
    %c0_63 = arith.constant 0 : index
    %c0_64 = arith.constant 0 : index
    %205 = vector.load %arg7[%c0_63, %c0_64] : memref<8x32xf32, #tpu.memory_space<vmem>>, vector<8x32xf32>
    tpu.vector_store %arg7[%c0_63, %c0_64], %197 {strides = array<i32>} : memref<8x32xf32, #tpu.memory_space<vmem>>, vector<8x32xf32>,
    %c56 = arith.constant 56 : index
    %c0_65 = arith.constant 0 : index
    %206 = vector.load %arg4[%c56, %c0_65] : memref<96x128xf32, #tpu.memory_space<vmem>>, vector<32x128xf32>
    %c88 = arith.constant 88 : index
    %c0_66 = arith.constant 0 : index
    %207 = vector.load %arg4[%c88, %c0_66] : memref<96x128xf32, #tpu.memory_space<vmem>>, vector<1x128xf32>
    %c0_67 = arith.constant 0 : index
    %c0_68 = arith.constant 0 : index
    %c0_69 = arith.constant 0 : index
    %208 = vector.load %arg9[%c0_67, %c0_68, %c0_69] : memref<8x8x32xf32, #tpu.memory_space<vmem>>, vector<8x8x32xf32>
    %209 = vector.shape_cast %208 : vector<8x8x32xf32> to vector<64x32xf32>
    %cst_70 = arith.constant dense<0.000000e+00> : vector<64x128xf32>
    %210 = tpu.matmul %209, %206, %cst_70 {dimension_numbers = #tpu.dot_dimension_numbers<[1], [0], [0], [1], [0, 0, 1, 1], [], []>} : vector<64x32xf32>, vector<32x128xf32>, vector<64x128xf32> -> vector<64x128xf32>
    %211 = vector.broadcast %207 : vector<1x128xf32> to vector<64x128xf32>
    %212 = arith.addf %210, %211 : vector<64x128xf32>
    %213 = vector.shape_cast %212 : vector<64x128xf32> to vector<8x8x128xf32>
    %c0_71 = arith.constant 0 : index
    %c0_72 = arith.constant 0 : index
    %c0_73 = arith.constant 0 : index
    %214 = vector.load %arg5[%c0_71, %c0_72, %c0_73] : memref<8x8x128xf32, #tpu.memory_space<vmem>>, vector<8x8x128xf32>
    tpu.vector_store %arg5[%c0_71, %c0_72, %c0_73], %213 {strides = array<i32>} : memref<8x8x128xf32, #tpu.memory_space<vmem>>, vector<8x8x128xf32>,
    return
  }
  func.func @transform_0(%arg0: i32) -> (i32, i32, i32) {
    %c0_i32 = arith.constant 0 : i32
    %c0_i32_0 = arith.constant 0 : i32
    %c0_i32_1 = arith.constant 0 : i32
    return %c0_i32, %arg0, %c0_i32_0 : i32, i32, i32
  }
  func.func @transform_1(%arg0: i32) -> (i32, i32) {
    %c0_i32 = arith.constant 0 : i32
    %c0_i32_0 = arith.constant 0 : i32
    return %arg0, %c0_i32 : i32, i32
  }
  func.func @transform_2(%arg0: i32) -> (i32, i32) {
    %c0_i32 = arith.constant 0 : i32
    %c0_i32_0 = arith.constant 0 : i32
    return %arg0, %c0_i32 : i32, i32
  }
  func.func @transform_3(%arg0: i32) -> (i32, i32) {
    %c0_i32 = arith.constant 0 : i32
    %c0_i32_0 = arith.constant 0 : i32
    %c0_i32_1 = arith.constant 0 : i32
    return %c0_i32, %c0_i32_0 : i32, i32
  }
  func.func @transform_4(%arg0: i32) -> (i32, i32, i32) {
    %c0_i32 = arith.constant 0 : i32
    %c0_i32_0 = arith.constant 0 : i32
    %c0_i32_1 = arith.constant 0 : i32
    return %c0_i32, %arg0, %c0_i32_0 : i32, i32, i32
  }
  func.func @transform_5(%arg0: i32) -> (i32, i32) {
    %c0_i32 = arith.constant 0 : i32
    %c0_i32_0 = arith.constant 0 : i32
    return %arg0, %c0_i32 : i32, i32
  }
  func.func @transform_6(%arg0: i32) -> (i32, i32) {
    %c0_i32 = arith.constant 0 : i32
    %c0_i32_0 = arith.constant 0 : i32
    return %arg0, %c0_i32 : i32, i32
  }
}

</mosaic_0001>

<llo_original>
// kernel: lstm_agent_rollout.1
$region0: #{lstm_agent_rollout.1}
  #allocation0 [shape = 'u32[]', space=smem, size = 0x4, offset = 0x4, fixed_abs, tag = 'smem constant byte address 0x4 - core index']
  #allocation1 [shape = 'u32[144,128]{1,0:T(1,128)}', space=vmem, size = 0x12000, scoped, tag = 'internal scratch']
  #allocation2 [shape = 'f32[8,8,128]{2,1,0:T(8,128)}', space=vmem, size = 0x8000, scoped, tag = 'scratch operand']
  #allocation3 [shape = 'f32[8,8,32]{2,1,0:T(8,128)}', space=vmem, size = 0x8000, scoped, tag = 'scratch operand']
  %s0 = inlined_call_operand.hbm [shape: f32[8,16,16], index: 0, kind: input, shape index: {}]
  %s1 = inlined_call_operand.hbm [shape: f32[16,32], index: 1, kind: input, shape index: {}]
  %s2 = inlined_call_operand.hbm [shape: f32[16,32], index: 2, kind: input, shape index: {}]
  %s3 = inlined_call_operand.hbm [shape: f32[96,128], index: 3, kind: input, shape index: {}]
  %s4 = inlined_call_operand.vmem [shape: f32[8,16,128], index: 4, kind: output, shape index: {0}]
  %s5 = inlined_call_operand.hbm [shape: f32[16,32], index: 5, kind: output, shape index: {1}]
  %s6 = inlined_call_operand.hbm [shape: f32[16,32], index: 6, kind: output, shape index: {2}]
  %7 = xla_tuple %s4, %s5, %s6
  %s8 = sld [smem:[#allocation0]]
  $region115: #{lstm_agent_rollout.1} parent=0
    _
  %s10 = ssub.s32 1, %s8
  %s11 = scalar_select 0, %s10, %s8
  $region1: #{lstm_agent_rollout.1} parent=0
    #allocation4 [shape = 'u8[65536]{0}', space=vmem, size = 0x10000, scoped, tag = 'input window, operand 0']
    #allocation5 [shape = 's32[2]{0}', space=sflag, size = 0x8, scoped, tag = 'scoped memory for lstm_agent_rollout.1']
    #allocation6 [shape = 's32[2]{0}', space=sflag, size = 0x8, scoped, tag = 'scoped memory for lstm_agent_rollout.1']
    #allocation7 [shape = 'u8[8192]{0}', space=vmem, size = 0x2000, scoped, tag = 'input window, operand 1']
    #allocation8 [shape = 's32[2]{0}', space=sflag, size = 0x8, scoped, tag = 'scoped memory for lstm_agent_rollout.1']
    #allocation9 [shape = 'u8[8192]{0}', space=vmem, size = 0x2000, scoped, tag = 'input window, operand 2']
    #allocation10 [shape = 'u8[49152]{0}', space=vmem, size = 0xc000, scoped, tag = 'input window, operand 3, single buffered']
    #allocation11 [shape = 's32[1]{0}', space=sflag, size = 0x4, scoped, tag = 'scoped memory for lstm_agent_rollout.1']
    #allocation12 [shape = 'u8[65536]{0}', space=vmem, size = 0x10000, scoped, tag = 'output window, operand 0']
    #allocation13 [shape = 'u8[8192]{0}', space=vmem, size = 0x2000, scoped, tag = 'output window, operand 1']
    #allocation14 [shape = 'u8[8192]{0}', space=vmem, size = 0x2000, scoped, tag = 'output window, operand 2']
    #allocation15 [shape = 's32[2]{0}', space=sflag, size = 0x8, scoped, tag = 'scoped memory for lstm_agent_rollout.1']
    %12 = vsyncpa [#allocation5], 0
    %s13 = scalar_lea.sflag [#allocation5], 1
    %14 = vsyncpa %s13, 0
    %15 = vsyncpa [#allocation8], 0
    %s16 = scalar_lea.sflag [#allocation8], 1
    %17 = vsyncpa %s16, 0
    %18 = vsyncpa [#allocation11], 0
    %19 = vsyncpa [#allocation6], 0
    %s20 = scalar_lea.sflag [#allocation6], 1
    %21 = vsyncpa %s20, 0
    %22 = vsyncpa [#allocation15], 0
    %s23 = scalar_lea.sflag [#allocation15], 1
    %24 = vsyncpa %s23, 0
    loop: start=0, step=1, limit=4
    $region2: #{lstm_agent_rollout.1} parent=1 // loop_pre_header
      _
    $region3: #{lstm_agent_rollout.1} parent=1 // loop_header
      %s26 = sphi 0, %s30
      %p27 = scmp.ge.s32.totalorder %s26, 4
      %s36 = sphi 0, %s38
      %s39 = sphi 0, %s36
      %s40 = sphi 0, %s39
      %s56 = sphi 0, %s40
      %s62 = sphi 0, %s64
      %s65 = sphi 0, %s62
      %s66 = sphi 0, %s65
      %s82 = sphi 0, %s66
      %s88 = sphi 0, %s90
      %s91 = sphi 0, %s88
      %s92 = sphi 0, %s91
      %s108 = sphi 0, %s92
      %s112 = sphi 0, %s112
      %s114 = sphi 0, %s112
      %s115 = sphi 0, %s114
      %s129 = sphi 0, %s115
      %s135 = sphi 0, %s137
      %s138 = sphi 0, %s135
      %s139 = sphi 0, %s138
      %s155 = sphi 0, %s139
      %s161 = sphi 0, %s163
      %s164 = sphi 0, %s161
      %s165 = sphi 0, %s164
      %s181 = sphi 0, %s165
      %s187 = sphi 0, %s189
      %s190 = sphi 0, %s187
      %s191 = sphi 0, %s190
      %s207 = sphi 0, %s191
    $region4: #{lstm_agent_rollout.1} parent=1 // loop_header_branch
      %29 = sbr.rel (%p27) target = $region8
    $region5: #{lstm_agent_rollout.1} parent=1 // loop_body
      %s31 = ssub.s32 %s26, 1
      %s32 = ssub.s32 %s26, 2
      %s33 = sadd.s32 %s26, 1
      %s34 = ssub.s32 %s26, %s33
      %p35 = scmp.eq.s32.totalorder %s34, 0
      %s37 = sadd.s32 %s36, 1
      %s38 = scalar_select %p35, %s36, %s37
      %p41 = pneg %p35
      %p42 = scmp.eq.s32.totalorder %s26, 1
      %p43 = por %p41, %p42
      %p44 = scmp.ne.s32.totalorder %s36, %s39
      %p45 = scmp.eq.s32.totalorder %s26, 0
      %p46 = por %p44, %p45
      %p47 = scmp.ne.s32.totalorder %s36, %s39
      %p48 = scmp.eq.s32.totalorder %s31, 1
      %p49 = por %p47, %p48
      %p50 = scmp.ne.s32.totalorder %s39, %s40
      %p51 = scmp.eq.s32.totalorder %s31, 0
      %p52 = por %p50, %p51
      %p53 = scmp.ne.s32.totalorder %s39, %s40
      %p54 = scmp.eq.s32.totalorder %s32, 1
      %p55 = por %p53, %p54
      %p57 = scmp.ne.s32.totalorder %s40, %s56
      %p58 = scmp.eq.s32.totalorder %s32, 0
      %p59 = por %p57, %p58
      %s60 = ssub.s32 %s26, %s33
      %p61 = scmp.eq.s32.totalorder %s60, 0
      %s63 = sadd.s32 %s62, 1
      %s64 = scalar_select %p61, %s62, %s63
      %p67 = pneg %p61
      %p68 = scmp.eq.s32.totalorder %s26, 1
      %p69 = por %p67, %p68
      %p70 = scmp.ne.s32.totalorder %s62, %s65
      %p71 = scmp.eq.s32.totalorder %s26, 0
      %p72 = por %p70, %p71
      %p73 = scmp.ne.s32.totalorder %s62, %s65
      %p74 = scmp.eq.s32.totalorder %s31, 1
      %p75 = por %p73, %p74
      %p76 = scmp.ne.s32.totalorder %s65, %s66
      %p77 = scmp.eq.s32.totalorder %s31, 0
      %p78 = por %p76, %p77
      %p79 = scmp.ne.s32.totalorder %s65, %s66
      %p80 = scmp.eq.s32.totalorder %s32, 1
      %p81 = por %p79, %p80
      %p83 = scmp.ne.s32.totalorder %s66, %s82
      %p84 = scmp.eq.s32.totalorder %s32, 0
      %p85 = por %p83, %p84
      %s86 = ssub.s32 %s26, %s33
      %p87 = scmp.eq.s32.totalorder %s86, 0
      %s89 = sadd.s32 %s88, 1
      %s90 = scalar_select %p87, %s88, %s89
      %p93 = pneg %p87
      %p94 = scmp.eq.s32.totalorder %s26, 1
      %p95 = por %p93, %p94
      %p96 = scmp.ne.s32.totalorder %s88, %s91
      %p97 = scmp.eq.s32.totalorder %s26, 0
      %p98 = por %p96, %p97
      %p99 = scmp.ne.s32.totalorder %s88, %s91
      %p100 = scmp.eq.s32.totalorder %s31, 1
      %p101 = por %p99, %p100
      %p102 = scmp.ne.s32.totalorder %s91, %s92
      %p103 = scmp.eq.s32.totalorder %s31, 0
      %p104 = por %p102, %p103
      %p105 = scmp.ne.s32.totalorder %s91, %s92
      %p106 = scmp.eq.s32.totalorder %s32, 1
      %p107 = por %p105, %p106
      %p109 = scmp.ne.s32.totalorder %s92, %s108
      %p110 = scmp.eq.s32.totalorder %s32, 0
      %p111 = por %p109, %p110
      %s113 = sadd.s32 %s112, 1
      %p116 = scmp.eq.s32.totalorder %s26, 1
      %p117 = scmp.ne.s32.totalorder %s112, %s114
      %p118 = scmp.eq.s32.totalorder %s26, 0
      %p119 = por %p117, %p118
      %p120 = scmp.ne.s32.totalorder %s112, %s114
      %p121 = scmp.eq.s32.totalorder %s31, 1
      %p122 = por %p120, %p121
      %p123 = scmp.ne.s32.totalorder %s114, %s115
      %p124 = scmp.eq.s32.totalorder %s31, 0
      %p125 = por %p123, %p124
      %p126 = scmp.ne.s32.totalorder %s114, %s115
      %p127 = scmp.eq.s32.totalorder %s32, 1
      %p128 = por %p126, %p127
      %p130 = scmp.ne.s32.totalorder %s115, %s129
      %p131 = scmp.eq.s32.totalorder %s32, 0
      %p132 = por %p130, %p131
      %s133 = ssub.s32 %s26, %s33
      %p134 = scmp.eq.s32.totalorder %s133, 0
      %s136 = sadd.s32 %s135, 1
      %s137 = scalar_select %p134, %s135, %s136
      %p140 = pneg %p134
      %p141 = scmp.eq.s32.totalorder %s26, 1
      %p142 = por %p140, %p141
      %p143 = scmp.ne.s32.totalorder %s135, %s138
      %p144 = scmp.eq.s32.totalorder %s26, 0
      %p145 = por %p143, %p144
      %p146 = scmp.ne.s32.totalorder %s135, %s138
      %p147 = scmp.eq.s32.totalorder %s31, 1
      %p148 = por %p146, %p147
      %p149 = scmp.ne.s32.totalorder %s138, %s139
      %p150 = scmp.eq.s32.totalorder %s31, 0
      %p151 = por %p149, %p150
      %p152 = scmp.ne.s32.totalorder %s138, %s139
      %p153 = scmp.eq.s32.totalorder %s32, 1
      %p154 = por %p152, %p153
      %p156 = scmp.ne.s32.totalorder %s139, %s155
      %p157 = scmp.eq.s32.totalorder %s32, 0
      %p158 = por %p156, %p157
      %s159 = ssub.s32 %s26, %s33
      %p160 = scmp.eq.s32.totalorder %s159, 0
      %s162 = sadd.s32 %s161, 1
      %s163 = scalar_select %p160, %s161, %s162
      %p166 = pneg %p160
      %p167 = scmp.eq.s32.totalorder %s26, 1
      %p168 = por %p166, %p167
      %p169 = scmp.ne.s32.totalorder %s161, %s164
      %p170 = scmp.eq.s32.totalorder %s26, 0
      %p171 = por %p169, %p170
      %p172 = scmp.ne.s32.totalorder %s161, %s164
      %p173 = scmp.eq.s32.totalorder %s31, 1
      %p174 = por %p172, %p173
      %p175 = scmp.ne.s32.totalorder %s164, %s165
      %p176 = scmp.eq.s32.totalorder %s31, 0
      %p177 = por %p175, %p176
      %p178 = scmp.ne.s32.totalorder %s164, %s165
      %p179 = scmp.eq.s32.totalorder %s32, 1
      %p180 = por %p178, %p179
      %p182 = scmp.ne.s32.totalorder %s165, %s181
      %p183 = scmp.eq.s32.totalorder %s32, 0
      %p184 = por %p182, %p183
      %s185 = ssub.s32 %s26, %s33
      %p186 = scmp.eq.s32.totalorder %s185, 0
      %s188 = sadd.s32 %s187, 1
      %s189 = scalar_select %p186, %s187, %s188
      %p192 = pneg %p186
      %p193 = scmp.eq.s32.totalorder %s26, 1
      %p194 = por %p192, %p193
      %p195 = scmp.ne.s32.totalorder %s187, %s190
      %p196 = scmp.eq.s32.totalorder %s26, 0
      %p197 = por %p195, %p196
      %p198 = scmp.ne.s32.totalorder %s187, %s190
      %p199 = scmp.eq.s32.totalorder %s31, 1
      %p200 = por %p198, %p199
      %p201 = scmp.ne.s32.totalorder %s190, %s191
      %p202 = scmp.eq.s32.totalorder %s31, 0
      %p203 = por %p201, %p202
      %p204 = scmp.ne.s32.totalorder %s190, %s191
      %p205 = scmp.eq.s32.totalorder %s32, 1
      %p206 = por %p204, %p205
      %p208 = scmp.ne.s32.totalorder %s191, %s207
      %p209 = scmp.eq.s32.totalorder %s32, 0
      %p210 = por %p208, %p209
      %p211 = scmp.le.s32.totalorder 1, %s26
      %p212 = scmp.lt.s32.totalorder %s26, 3
      %p213 = pnand %p211, %p212
      %p214 = pneg %p213
      // Predicated region
      $region9: #{lstm_agent_rollout.1} parent=5 // pred_check
        _
      $region10: #{lstm_agent_rollout.1} parent=5 // pred_check_branch
        %216 = sbr.rel (%p213) target = $region12
      $region11: #{lstm_agent_rollout.1} parent=5 // pred_region
        %s217 = ssub.s32 %s26, 1
        // Predicated region
        $region13: #{lstm_agent_rollout.1} parent=11 // pred_check
          %p218 = pneg %p125
        $region14: #{lstm_agent_rollout.1} parent=11 // pred_check_branch
          %220 = sbr.rel (%p218) target = $region16
        $region15: #{lstm_agent_rollout.1} parent=11 // pred_region
          %s222 = ssub.s32 1536, 1536
          %223 = vsyncadd [#allocation11], %s222
          %s224 = sshll.u32 [#allocation10], 4
          %s225 = int_to_ptr.vmem [resolvable:$true] %s224
          %230 = dma.hbm_to_vmem [thread:$0]  %s3, 1536, %s225, [#allocation11], 128, 128, 8
        $region16: #{lstm_agent_rollout.1} parent=11 // pred_fallthru
          _
      $region12: #{lstm_agent_rollout.1} parent=5 // pred_fallthru
        _
      %p231 = scmp.lt.s32.totalorder %s26, 2
      // Predicated region
      $region17: #{lstm_agent_rollout.1} parent=5 // pred_check
        %p232 = pneg %p231
      $region18: #{lstm_agent_rollout.1} parent=5 // pred_check_branch
        %234 = sbr.rel (%p232) target = $region20
      $region19: #{lstm_agent_rollout.1} parent=5 // pred_region
        // Predicated region
        $region21: #{lstm_agent_rollout.1} parent=19 // pred_check
          %p235 = pneg %p46
        $region22: #{lstm_agent_rollout.1} parent=19 // pred_check_branch
          %237 = sbr.rel (%p235) target = $region24
        $region23: #{lstm_agent_rollout.1} parent=19 // pred_region
          %s238 = sand.u32 %s36, 1
          %s239 = scalar_lea.sflag [#allocation5], %s238
          %s240 = sand.u32 %s36, 1
          %s241 = smul.addr %s240, 64
          %s242 = scalar_lea.vmem [#allocation4], %s241
          %s244 = ssub.s32 1024, 1024
          %245 = vsyncadd %s239, %s244
          %s246 = smul.addr %s26, 128
          %s247 = scalar_lea.hbm %s0, %s246
          %s248 = sshll.u32 %s242, 4
          %s249 = int_to_ptr.vmem [resolvable:$true] %s248
          %254 = dma.hbm_to_vmem [thread:$0]  %s247, 1024, %s249, %s239, 256, 128, 8
        $region24: #{lstm_agent_rollout.1} parent=19 // pred_fallthru
          _
        // Predicated region
        $region25: #{lstm_agent_rollout.1} parent=19 // pred_check
          %p255 = pneg %p72
        $region26: #{lstm_agent_rollout.1} parent=19 // pred_check_branch
          %257 = sbr.rel (%p255) target = $region28
        $region27: #{lstm_agent_rollout.1} parent=19 // pred_region
          %s258 = sand.u32 %s26, 1
          %s259 = scalar_lea.sflag [#allocation8], %s258
          %s260 = sand.u32 %s62, 1
          %s261 = smul.addr %s260, 8
          %s262 = scalar_lea.vmem [#allocation7], %s261
          %s264 = ssub.s32 128, 128
          %265 = vsyncadd %s259, %s264
          %s266 = smul.addr %s26, 128
          %s267 = scalar_lea.hbm %s1, %s266
          %s269 = sshll.u32 %s262, 4
          %s270 = int_to_ptr.vmem [resolvable:$true] %s269
          %272 = dma.hbm_to_vmem [thread:$0]  %s267, 128, %s270, %s259
        $region28: #{lstm_agent_rollout.1} parent=19 // pred_fallthru
          _
        // Predicated region
        $region29: #{lstm_agent_rollout.1} parent=19 // pred_check
          %p273 = pneg %p98
        $region30: #{lstm_agent_rollout.1} parent=19 // pred_check_branch
          %275 = sbr.rel (%p273) target = $region32
        $region31: #{lstm_agent_rollout.1} parent=19 // pred_region
          %s276 = sand.u32 %s26, 1
          %s277 = scalar_lea.sflag [#allocation8], %s276
          %s278 = sand.u32 %s88, 1
          %s279 = smul.addr %s278, 8
          %s280 = scalar_lea.vmem [#allocation9], %s279
          %s282 = ssub.s32 128, 128
          %283 = vsyncadd %s277, %s282
          %s284 = smul.addr %s26, 128
          %s285 = scalar_lea.hbm %s2, %s284
          %s287 = sshll.u32 %s280, 4
          %s288 = int_to_ptr.vmem [resolvable:$true] %s287
          %290 = dma.hbm_to_vmem [thread:$0]  %s285, 128, %s288, %s277
        $region32: #{lstm_agent_rollout.1} parent=19 // pred_fallthru
          _
      $region20: #{lstm_agent_rollout.1} parent=5 // pred_fallthru
        _
      %p291 = scmp.le.s32.totalorder 1, %s26
      %p292 = scmp.lt.s32.totalorder %s26, 3
      %p293 = pnand %p291, %p292
      %p294 = pneg %p293
      // Predicated region
      $region33: #{lstm_agent_rollout.1} parent=5 // pred_check
        _
      $region34: #{lstm_agent_rollout.1} parent=5 // pred_check_branch
        %296 = sbr.rel (%p293) target = $region36
      $region35: #{lstm_agent_rollout.1} parent=5 // pred_region
        %s297 = ssub.s32 %s26, 1
        %s298 = sand.u32 %s39, 1
        %s299 = scalar_lea.sflag [#allocation5], %s298
        %s300 = sand.u32 %s39, 1
        %s301 = smul.addr %s300, 64
        %s302 = scalar_lea.vmem [#allocation4], %s301
        // Predicated region
        $region37: #{lstm_agent_rollout.1} parent=35 // pred_check
          %p303 = pneg %p52
        $region38: #{lstm_agent_rollout.1} parent=35 // pred_check_branch
          %305 = sbr.rel (%p303) target = $region40
        $region39: #{lstm_agent_rollout.1} parent=35 // pred_region
          %306 = dma.done %s299, 1024
        $region40: #{lstm_agent_rollout.1} parent=35 // pred_fallthru
          _
        %s307 = sand.u32 %s31, 1
        %s308 = scalar_lea.sflag [#allocation8], %s307
        %s309 = sand.u32 %s65, 1
        %s310 = smul.addr %s309, 8
        %s311 = scalar_lea.vmem [#allocation7], %s310
        // Predicated region
        $region41: #{lstm_agent_rollout.1} parent=35 // pred_check
          %p312 = pneg %p78
        $region42: #{lstm_agent_rollout.1} parent=35 // pred_check_branch
          %314 = sbr.rel (%p312) target = $region44
        $region43: #{lstm_agent_rollout.1} parent=35 // pred_region
          %315 = dma.done %s308, 128
        $region44: #{lstm_agent_rollout.1} parent=35 // pred_fallthru
          _
        %s316 = sand.u32 %s31, 1
        %s317 = scalar_lea.sflag [#allocation8], %s316
        %s318 = sand.u32 %s91, 1
        %s319 = smul.addr %s318, 8
        %s320 = scalar_lea.vmem [#allocation9], %s319
        // Predicated region
        $region45: #{lstm_agent_rollout.1} parent=35 // pred_check
          %p321 = pneg %p104
        $region46: #{lstm_agent_rollout.1} parent=35 // pred_check_branch
          %323 = sbr.rel (%p321) target = $region48
        $region47: #{lstm_agent_rollout.1} parent=35 // pred_region
          %324 = dma.done %s317, 128
        $region48: #{lstm_agent_rollout.1} parent=35 // pred_fallthru
          _
        // Predicated region
        $region49: #{lstm_agent_rollout.1} parent=35 // pred_check
          %p325 = pneg %p125
        $region50: #{lstm_agent_rollout.1} parent=35 // pred_check_branch
          %327 = sbr.rel (%p325) target = $region52
        $region51: #{lstm_agent_rollout.1} parent=35 // pred_region
          %328 = dma.done [#allocation11], 1536
        $region52: #{lstm_agent_rollout.1} parent=35 // pred_fallthru
          _
        %s329 = sand.u32 %s39, 1
        %s330 = scalar_lea.sflag [#allocation5], %s329
        %s331 = sand.u32 %s39, 1
        %s332 = smul.addr %s331, 64
        %s333 = scalar_lea.vmem [#allocation4], %s332
        %p334 = pneg %p52
        %p335 = pneg %p49
        %s336 = sand.u32 %s31, 1
        %s337 = scalar_lea.sflag [#allocation8], %s336
        %s338 = sand.u32 %s65, 1
        %s339 = smul.addr %s338, 8
        %s340 = scalar_lea.vmem [#allocation7], %s339
        %p341 = pneg %p78
        %p342 = pneg %p75
        %s343 = sand.u32 %s31, 1
        %s344 = scalar_lea.sflag [#allocation8], %s343
        %s345 = sand.u32 %s91, 1
        %s346 = smul.addr %s345, 8
        %s347 = scalar_lea.vmem [#allocation9], %s346
        %p348 = pneg %p104
        %p349 = pneg %p101
        %p350 = pneg %p125
        %p351 = pneg %p122
        %p352 = pneg %p151
        %p353 = pneg %p148
        %s354 = sand.u32 %s138, 1
        %s355 = sand.u32 %s138, 1
        %s356 = smul.addr %s355, 64
        %s357 = scalar_lea.vmem [#allocation12], %s356
        %p358 = pneg %p177
        %p359 = pneg %p174
        %s360 = sand.u32 %s164, 1
        %s361 = scalar_lea.sflag [#allocation6], %s360
        %s362 = sand.u32 %s164, 1
        %s363 = smul.addr %s362, 8
        %s364 = scalar_lea.vmem [#allocation13], %s363
        %p365 = pneg %p203
        %p366 = pneg %p200
        %s367 = sand.u32 %s190, 1
        %s368 = scalar_lea.sflag [#allocation15], %s367
        %s369 = sand.u32 %s190, 1
        %s370 = smul.addr %s369, 8
        %s371 = scalar_lea.vmem [#allocation14], %s370
        %v372 = vld [vmem:[#allocation10] sm:$0xff]
        %v373 = vld [vmem:[#allocation10 + $0x8] sm:$0xff]
        %v374 = vld [vmem:[#allocation10 + $0x30] sm:$0x1]
        %v375 = vld [vmem:[%s302] sm:$0xff]
        %v376 = vld [vmem:[%s302 + $0x8] sm:$0xff]
        %v377 = vld [vmem:[%s302 + $0x10] sm:$0xff]
        %v378 = vld [vmem:[%s302 + $0x18] sm:$0xff]
        %v379 = vld [vmem:[%s302 + $0x20] sm:$0xff]
        %v380 = vld [vmem:[%s302 + $0x28] sm:$0xff]
        %v381 = vld [vmem:[%s302 + $0x30] sm:$0xff]
        %v382 = vld [vmem:[%s302 + $0x38] sm:$0xff]
        %v383 = vlaneseq
        %v384 = vshrl.u32 %v383, 7
        %v385 = vsub.s32 0, %v384
        %v386 = vrot.slane %v374, %v385
        %vm387 = vcmask 130048
        %v389 = vsel %vm387, %v375, 0
        %v392 = vsel %vm387, %v376, 0
        %v395 = vsel %vm387, %v377, 0
        %v398 = vsel %vm387, %v378, 0
        %v401 = vsel %vm387, %v379, 0
        %v404 = vsel %vm387, %v380, 0
        %v407 = vsel %vm387, %v381, 0
        %v410 = vsel %vm387, %v382, 0
        %412 = vmatprep.subr.mxu0 0.0
        %413 = vmatpush1.msra.mxu0 %v372
        %414 = vmatprep.subr.mxu0 0.0
        %415 = vmatpush1.msra.mxu0 %v373
        %416 = vmatprep.subr.mxu0 0.0
        %417 = vmatpush1.msra.mxu0 0.0
        %418 = vmatprep.subr.mxu0 0.0
        %419 = vmatpush1.msra.mxu0 0.0
        %420 = vmatprep.subr.mxu0 0.0
        %421 = vmatpush1.msra.mxu0 0.0
        %422 = vmatprep.subr.mxu0 0.0
        %423 = vmatpush1.msra.mxu0 0.0
        %424 = vmatprep.subr.mxu0 0.0
        %425 = vmatpush1.msra.mxu0 0.0
        %426 = vmatprep.subr.mxu0 0.0
        %427 = vmatpush1.msra.mxu0 0.0
        %428 = vmatprep.subr.mxu0 0.0
        %429 = vmatpush1.msra.mxu0 0.0
        %430 = vmatprep.subr.mxu0 0.0
        %431 = vmatpush1.msra.mxu0 0.0
        %432 = vmatprep.subr.mxu0 0.0
        %433 = vmatpush1.msra.mxu0 0.0
        %434 = vmatprep.subr.mxu0 0.0
        %435 = vmatpush1.msra.mxu0 0.0
        %436 = vmatprep.subr.mxu0 0.0
        %437 = vmatpush1.msra.mxu0 0.0
        %438 = vmatprep.subr.mxu0 0.0
        %439 = vmatpush1.msra.mxu0 0.0
        %440 = vmatprep.subr.mxu0 0.0
        %441 = vmatpush1.msra.mxu0 0.0
        %442 = vmatprep.subr.mxu0 0.0
        %443 = vmatpush1.msra.mxu0 0.0
        %444 = vmatprep.subr.mxu0 0.0
        %445 = vmatpush1.msra.mxu0 0.0
        %446 = vmatprep.subr.mxu0 0.0
        %447 = vmatpush1.msra.mxu0 0.0
        %448 = vmatprep.subr.mxu0 0.0
        %449 = vmatpush1.msra.mxu0 0.0
        %450 = vmatprep.subr.mxu0 0.0
        %451 = vmatpush1.msra.mxu0 0.0
        %452 = vmatprep.subr.mxu0 0.0
        %453 = vmatpush1.msra.mxu0 0.0
        %454 = vmatprep.subr.mxu0 0.0
        %455 = vmatpush1.msra.mxu0 0.0
        %456 = vmatprep.subr.mxu0 0.0
        %457 = vmatpush1.msra.mxu0 0.0
        %458 = vmatprep.subr.mxu0 0.0
        %459 = vmatpush1.msra.mxu0 0.0
        %460 = vmatprep.subr.mxu0 0.0
        %461 = vmatpush1.msra.mxu0 0.0
        %462 = vmatprep.subr.mxu0 0.0
        %463 = vmatpush1.msra.mxu0 0.0
        %464 = vmatprep.subr.mxu0 0.0
        %465 = vmatpush1.msra.mxu0 0.0
        %466 = vmatprep.subr.mxu0 0.0
        %467 = vmatpush1.msra.mxu0 0.0
        %468 = vmatprep.subr.mxu0 0.0
        %469 = vmatpush1.msra.mxu0 0.0
        %470 = vmatprep.subr.mxu0 0.0
        %471 = vmatpush1.msra.mxu0 0.0
        %472 = vmatprep.subr.mxu0 0.0
        %473 = vmatpush1.msra.mxu0 0.0
        %474 = vmatprep.subr.mxu0 0.0
        %475 = vmatpush1.msra.mxu0 0.0
        %476 = vmatprep.mubr.f32.mxu0 0.0
        %477 = vmatmul.mubr.f32.gmra.mrb[0].mxu0 %v389
        %v478 = vpop.f32.mrb[0].mxu0
        %v479 = vadd.f32 %v386, %v478
        %v480 = vpop.f32.mrb[0].mxu0
        %481 = vmatprep.mubr.f32.mxu0 0.0
        %482 = vmatmul.mubr.f32.gmra.mrb[0].mxu0 %v392
        %v483 = vpop.f32.mrb[0].mxu0
        %v484 = vadd.f32 %v386, %v483
        %v485 = vpop.f32.mrb[0].mxu0
        %486 = vmatprep.mubr.f32.mxu0 0.0
        %487 = vmatmul.mubr.f32.gmra.mrb[0].mxu0 %v395
        %v488 = vpop.f32.mrb[0].mxu0
        %v489 = vadd.f32 %v386, %v488
        %v490 = vpop.f32.mrb[0].mxu0
        %491 = vmatprep.mubr.f32.mxu0 0.0
        %492 = vmatmul.mubr.f32.gmra.mrb[0].mxu0 %v398
        %v493 = vpop.f32.mrb[0].mxu0
        %v494 = vadd.f32 %v386, %v493
        %v495 = vpop.f32.mrb[0].mxu0
        %496 = vmatprep.mubr.f32.mxu0 0.0
        %497 = vmatmul.mubr.f32.gmra.mrb[0].mxu0 %v401
        %v498 = vpop.f32.mrb[0].mxu0
        %v499 = vadd.f32 %v386, %v498
        %v500 = vpop.f32.mrb[0].mxu0
        %501 = vmatprep.mubr.f32.mxu0 0.0
        %502 = vmatmul.mubr.f32.gmra.mrb[0].mxu0 %v404
        %v503 = vpop.f32.mrb[0].mxu0
        %v504 = vadd.f32 %v386, %v503
        %v505 = vpop.f32.mrb[0].mxu0
        %506 = vmatprep.mubr.f32.mxu0 0.0
        %507 = vmatmul.mubr.f32.gmra.mrb[0].mxu0 %v407
        %v508 = vpop.f32.mrb[0].mxu0
        %v509 = vadd.f32 %v386, %v508
        %v510 = vpop.f32.mrb[0].mxu0
        %511 = vmatprep.mubr.f32.mxu0 0.0
        %512 = vmatmul.mubr.f32.gmra.mrb[0].mxu0 %v410
        %v513 = vpop.f32.mrb[0].mxu0
        %v514 = vadd.f32 %v386, %v513
        %v515 = vpop.f32.mrb[0].mxu0
        %516 = vdwg.mxu0
        %517 = vst [vmem:[#allocation2] sm:$0xff] %v479
        %518 = vst [vmem:[#allocation2 + $0x8] sm:$0xff] %v484
        %519 = vst [vmem:[#allocation2 + $0x10] sm:$0xff] %v489
        %520 = vst [vmem:[#allocation2 + $0x18] sm:$0xff] %v494
        %521 = vst [vmem:[#allocation2 + $0x20] sm:$0xff] %v499
        %522 = vst [vmem:[#allocation2 + $0x28] sm:$0xff] %v504
        %523 = vst [vmem:[#allocation2 + $0x30] sm:$0xff] %v509
        %524 = vst [vmem:[#allocation2 + $0x38] sm:$0xff] %v514
        %v525 = vld [vmem:[#allocation10 + $0x10] sm:$0xff]
        %v526 = vld [vmem:[#allocation10 + $0x18] sm:$0xff]
        %v527 = vld [vmem:[#allocation10 + $0x20] sm:$0xff]
        %v528 = vld [vmem:[#allocation10 + $0x28] sm:$0xff]
        %v529 = vld [vmem:[%s311] sm:$0xff]
        %v530 = vld [vmem:[%s320] sm:$0xff]
        %v531 = vld [vmem:[#allocation2] sm:$0xff]
        %vm532 = vcmask 261120
        %v534 = vsel %vm532, %v529, 0
        %536 = vmatprep.subr.mxu0 0.0
        %537 = vmatpush1.msra.mxu0 %v525
        %538 = vmatprep.subr.mxu0 0.0
        %539 = vmatpush1.msra.mxu0 %v526
        %540 = vmatprep.subr.mxu0 0.0
        %541 = vmatpush1.msra.mxu0 %v527
        %542 = vmatprep.subr.mxu0 0.0
        %543 = vmatpush1.msra.mxu0 %v528
        %544 = vmatprep.subr.mxu0 0.0
        %545 = vmatpush1.msra.mxu0 0.0
        %546 = vmatprep.subr.mxu0 0.0
        %547 = vmatpush1.msra.mxu0 0.0
        %548 = vmatprep.subr.mxu0 0.0
        %549 = vmatpush1.msra.mxu0 0.0
        %550 = vmatprep.subr.mxu0 0.0
        %551 = vmatpush1.msra.mxu0 0.0
        %552 = vmatprep.subr.mxu0 0.0
        %553 = vmatpush1.msra.mxu0 0.0
        %554 = vmatprep.subr.mxu0 0.0
        %555 = vmatpush1.msra.mxu0 0.0
        %556 = vmatprep.subr.mxu0 0.0
        %557 = vmatpush1.msra.mxu0 0.0
        %558 = vmatprep.subr.mxu0 0.0
        %559 = vmatpush1.msra.mxu0 0.0
        %560 = vmatprep.subr.mxu0 0.0
        %561 = vmatpush1.msra.mxu0 0.0
        %562 = vmatprep.subr.mxu0 0.0
        %563 = vmatpush1.msra.mxu0 0.0
        %564 = vmatprep.subr.mxu0 0.0
        %565 = vmatpush1.msra.mxu0 0.0
        %566 = vmatprep.subr.mxu0 0.0
        %567 = vmatpush1.msra.mxu0 0.0
        %568 = vmatprep.subr.mxu0 0.0
        %569 = vmatpush1.msra.mxu0 0.0
        %570 = vmatprep.subr.mxu0 0.0
        %571 = vmatpush1.msra.mxu0 0.0
        %572 = vmatprep.subr.mxu0 0.0
        %573 = vmatpush1.msra.mxu0 0.0
        %574 = vmatprep.subr.mxu0 0.0
        %575 = vmatpush1.msra.mxu0 0.0
        %576 = vmatprep.subr.mxu0 0.0
        %577 = vmatpush1.msra.mxu0 0.0
        %578 = vmatprep.subr.mxu0 0.0
        %579 = vmatpush1.msra.mxu0 0.0
        %580 = vmatprep.subr.mxu0 0.0
        %581 = vmatpush1.msra.mxu0 0.0
        %582 = vmatprep.subr.mxu0 0.0
        %583 = vmatpush1.msra.mxu0 0.0
        %584 = vmatprep.subr.mxu0 0.0
        %585 = vmatpush1.msra.mxu0 0.0
        %586 = vmatprep.subr.mxu0 0.0
        %587 = vmatpush1.msra.mxu0 0.0
        %588 = vmatprep.subr.mxu0 0.0
        %589 = vmatpush1.msra.mxu0 0.0
        %590 = vmatprep.subr.mxu0 0.0
        %591 = vmatpush1.msra.mxu0 0.0
        %592 = vmatprep.subr.mxu0 0.0
        %593 = vmatpush1.msra.mxu0 0.0
        %594 = vmatprep.subr.mxu0 0.0
        %595 = vmatpush1.msra.mxu0 0.0
        %596 = vmatprep.subr.mxu0 0.0
        %597 = vmatpush1.msra.mxu0 0.0
        %598 = vmatprep.subr.mxu0 0.0
        %599 = vmatpush1.msra.mxu0 0.0
        %600 = vmatprep.mubr.f32.mxu0 0.0
        %601 = vmatmul.mubr.f32.gmra.mrb[0].mxu0 %v534
        %v602 = vpop.f32.mrb[0].mxu0
        %v603 = vadd.f32 %v531, %v602
        %v604 = vpop.f32.mrb[0].mxu0
        %605 = vdwg.mxu0
        %v606 = vxor.u32 %v603, 2147483648
        %v607 = vmul.f32 %v606, 1.442695
        %v608 = vpow.pop %v607
        %v609 = vadd.f32 %v608, 1.0
        %v610 = vrcp.pop %v609
        %v611 = vmul.f32 1.0, %v610
        %v612 = vtanh.pop %v603
        %614 = vrot.lane.b32.xlu0 %v530, 32
        %v615 = vpop.permute.xlu0 %614
        %v617 = vmul.f32 %v611, %v615
        %619 = vrot.lane.b32.xlu0 %v612, 64
        %v620 = vpop.permute.xlu0 %619
        %v622 = vmul.f32 %v611, %v620
        %624 = vrot.lane.b32.xlu0 %v622, 32
        %v625 = vpop.permute.xlu0 %624
        %v627 = vadd.f32 %v617, %v625
        %v628 = vtanh.pop %v627
        %630 = vrot.lane.b32.xlu0 %v628, 64
        %v631 = vpop.permute.xlu0 %630
        %v633 = vmul.f32 %v611, %v631
        %635 = vrot.lane.b32.xlu0 %v633, 32
        %v636 = vpop.permute.xlu0 %635
        %638 = vst.msk [vmem:[#allocation3] sm:$0xff] %vm532, %v636
        %s639 = scalar_lea.vmem [#allocation2], 8
        %v640 = vld [vmem:[%s639] sm:$0xff]
        %v641 = vsel %vm532, %v636, 0
        %643 = vmatprep.subr.mxu0 0.0
        %644 = vmatpush1.msra.mxu0 %v525
        %645 = vmatprep.subr.mxu0 0.0
        %646 = vmatpush1.msra.mxu0 %v526
        %647 = vmatprep.subr.mxu0 0.0
        %648 = vmatpush1.msra.mxu0 %v527
        %649 = vmatprep.subr.mxu0 0.0
        %650 = vmatpush1.msra.mxu0 %v528
        %651 = vmatprep.subr.mxu0 0.0
        %652 = vmatpush1.msra.mxu0 0.0
        %653 = vmatprep.subr.mxu0 0.0
        %654 = vmatpush1.msra.mxu0 0.0
        %655 = vmatprep.subr.mxu0 0.0
        %656 = vmatpush1.msra.mxu0 0.0
        %657 = vmatprep.subr.mxu0 0.0
        %658 = vmatpush1.msra.mxu0 0.0
        %659 = vmatprep.subr.mxu0 0.0
        %660 = vmatpush1.msra.mxu0 0.0
        %661 = vmatprep.subr.mxu0 0.0
        %662 = vmatpush1.msra.mxu0 0.0
        %663 = vmatprep.subr.mxu0 0.0
        %664 = vmatpush1.msra.mxu0 0.0
        %665 = vmatprep.subr.mxu0 0.0
        %666 = vmatpush1.msra.mxu0 0.0
        %667 = vmatprep.subr.mxu0 0.0
        %668 = vmatpush1.msra.mxu0 0.0
        %669 = vmatprep.subr.mxu0 0.0
        %670 = vmatpush1.msra.mxu0 0.0
        %671 = vmatprep.subr.mxu0 0.0
        %672 = vmatpush1.msra.mxu0 0.0
        %673 = vmatprep.subr.mxu0 0.0
        %674 = vmatpush1.msra.mxu0 0.0
        %675 = vmatprep.subr.mxu0 0.0
        %676 = vmatpush1.msra.mxu0 0.0
        %677 = vmatprep.subr.mxu0 0.0
        %678 = vmatpush1.msra.mxu0 0.0
        %679 = vmatprep.subr.mxu0 0.0
        %680 = vmatpush1.msra.mxu0 0.0
        %681 = vmatprep.subr.mxu0 0.0
        %682 = vmatpush1.msra.mxu0 0.0
        %683 = vmatprep.subr.mxu0 0.0
        %684 = vmatpush1.msra.mxu0 0.0
        %685 = vmatprep.subr.mxu0 0.0
        %686 = vmatpush1.msra.mxu0 0.0
        %687 = vmatprep.subr.mxu0 0.0
        %688 = vmatpush1.msra.mxu0 0.0
        %689 = vmatprep.subr.mxu0 0.0
        %690 = vmatpush1.msra.mxu0 0.0
        %691 = vmatprep.subr.mxu0 0.0
        %692 = vmatpush1.msra.mxu0 0.0
        %693 = vmatprep.subr.mxu0 0.0
        %694 = vmatpush1.msra.mxu0 0.0
        %695 = vmatprep.subr.mxu0 0.0
        %696 = vmatpush1.msra.mxu0 0.0
        %697 = vmatprep.subr.mxu0 0.0
        %698 = vmatpush1.msra.mxu0 0.0
        %699 = vmatprep.subr.mxu0 0.0
        %700 = vmatpush1.msra.mxu0 0.0
        %701 = vmatprep.subr.mxu0 0.0
        %702 = vmatpush1.msra.mxu0 0.0
        %703 = vmatprep.subr.mxu0 0.0
        %704 = vmatpush1.msra.mxu0 0.0
        %705 = vmatprep.subr.mxu0 0.0
        %706 = vmatpush1.msra.mxu0 0.0
        %707 = vmatprep.mubr.f32.mxu0 0.0
        %708 = vmatmul.mubr.f32.gmra.mrb[0].mxu0 %v641
        %v709 = vpop.f32.mrb[0].mxu0
        %v710 = vadd.f32 %v640, %v709
        %v711 = vpop.f32.mrb[0].mxu0
        %712 = vdwg.mxu0
        %v713 = vxor.u32 %v710, 2147483648
        %v714 = vmul.f32 %v713, 1.442695
        %v715 = vpow.pop %v714
        %v716 = vadd.f32 %v715, 1.0
        %v717 = vrcp.pop %v716
        %v718 = vmul.f32 1.0, %v717
        %v719 = vtanh.pop %v710
        %v720 = vmul.f32 %v718, %v627
        %722 = vrot.lane.b32.xlu0 %v719, 64
        %v723 = vpop.permute.xlu0 %722
        %v725 = vmul.f32 %v718, %v723
        %727 = vrot.lane.b32.xlu0 %v725, 32
        %v728 = vpop.permute.xlu0 %727
        %v730 = vadd.f32 %v720, %v728
        %v731 = vtanh.pop %v730
        %733 = vrot.lane.b32.xlu0 %v731, 64
        %v734 = vpop.permute.xlu0 %733
        %v736 = vmul.f32 %v718, %v734
        %738 = vrot.lane.b32.xlu0 %v736, 32
        %v739 = vpop.permute.xlu0 %738
        %s741 = scalar_lea.vmem [#allocation3], 8
        %742 = vst.msk [vmem:[%s741] sm:$0xff] %vm532, %v739
        %s743 = scalar_lea.vmem [#allocation2], 16
        %v744 = vld [vmem:[%s743] sm:$0xff]
        %v745 = vsel %vm532, %v739, 0
        %747 = vmatprep.subr.mxu0 0.0
        %748 = vmatpush1.msra.mxu0 %v525
        %749 = vmatprep.subr.mxu0 0.0
        %750 = vmatpush1.msra.mxu0 %v526
        %751 = vmatprep.subr.mxu0 0.0
        %752 = vmatpush1.msra.mxu0 %v527
        %753 = vmatprep.subr.mxu0 0.0
        %754 = vmatpush1.msra.mxu0 %v528
        %755 = vmatprep.subr.mxu0 0.0
        %756 = vmatpush1.msra.mxu0 0.0
        %757 = vmatprep.subr.mxu0 0.0
        %758 = vmatpush1.msra.mxu0 0.0
        %759 = vmatprep.subr.mxu0 0.0
        %760 = vmatpush1.msra.mxu0 0.0
        %761 = vmatprep.subr.mxu0 0.0
        %762 = vmatpush1.msra.mxu0 0.0
        %763 = vmatprep.subr.mxu0 0.0
        %764 = vmatpush1.msra.mxu0 0.0
        %765 = vmatprep.subr.mxu0 0.0
        %766 = vmatpush1.msra.mxu0 0.0
        %767 = vmatprep.subr.mxu0 0.0
        %768 = vmatpush1.msra.mxu0 0.0
        %769 = vmatprep.subr.mxu0 0.0
        %770 = vmatpush1.msra.mxu0 0.0
        %771 = vmatprep.subr.mxu0 0.0
        %772 = vmatpush1.msra.mxu0 0.0
        %773 = vmatprep.subr.mxu0 0.0
        %774 = vmatpush1.msra.mxu0 0.0
        %775 = vmatprep.subr.mxu0 0.0
        %776 = vmatpush1.msra.mxu0 0.0
        %777 = vmatprep.subr.mxu0 0.0
        %778 = vmatpush1.msra.mxu0 0.0
        %779 = vmatprep.subr.mxu0 0.0
        %780 = vmatpush1.msra.mxu0 0.0
        %781 = vmatprep.subr.mxu0 0.0
        %782 = vmatpush1.msra.mxu0 0.0
        %783 = vmatprep.subr.mxu0 0.0
        %784 = vmatpush1.msra.mxu0 0.0
        %785 = vmatprep.subr.mxu0 0.0
        %786 = vmatpush1.msra.mxu0 0.0
        %787 = vmatprep.subr.mxu0 0.0
        %788 = vmatpush1.msra.mxu0 0.0
        %789 = vmatprep.subr.mxu0 0.0
        %790 = vmatpush1.msra.mxu0 0.0
        %791 = vmatprep.subr.mxu0 0.0
        %792 = vmatpush1.msra.mxu0 0.0
        %793 = vmatprep.subr.mxu0 0.0
        %794 = vmatpush1.msra.mxu0 0.0
        %795 = vmatprep.subr.mxu0 0.0
        %796 = vmatpush1.msra.mxu0 0.0
        %797 = vmatprep.subr.mxu0 0.0
        %798 = vmatpush1.msra.mxu0 0.0
        %799 = vmatprep.subr.mxu0 0.0
        %800 = vmatpush1.msra.mxu0 0.0
        %801 = vmatprep.subr.mxu0 0.0
        %802 = vmatpush1.msra.mxu0 0.0
        %803 = vmatprep.subr.mxu0 0.0
        %804 = vmatpush1.msra.mxu0 0.0
        %805 = vmatprep.subr.mxu0 0.0
        %806 = vmatpush1.msra.mxu0 0.0
        %807 = vmatprep.subr.mxu0 0.0
        %808 = vmatpush1.msra.mxu0 0.0
        %809 = vmatprep.subr.mxu0 0.0
        %810 = vmatpush1.msra.mxu0 0.0
        %811 = vmatprep.mubr.f32.mxu0 0.0
        %812 = vmatmul.mubr.f32.gmra.mrb[0].mxu0 %v745
        %v813 = vpop.f32.mrb[0].mxu0
        %v814 = vadd.f32 %v744, %v813
        %v815 = vpop.f32.mrb[0].mxu0
        %816 = vdwg.mxu0
        %v817 = vxor.u32 %v814, 2147483648
        %v818 = vmul.f32 %v817, 1.442695
        %v819 = vpow.pop %v818
        %v820 = vadd.f32 %v819, 1.0
        %v821 = vrcp.pop %v820
        %v822 = vmul.f32 1.0, %v821
        %v823 = vtanh.pop %v814
        %v824 = vmul.f32 %v822, %v730
        %826 = vrot.lane.b32.xlu0 %v823, 64
        %v827 = vpop.permute.xlu0 %826
        %v829 = vmul.f32 %v822, %v827
        %831 = vrot.lane.b32.xlu0 %v829, 32
        %v832 = vpop.permute.xlu0 %831
        %v834 = vadd.f32 %v824, %v832
        %v835 = vtanh.pop %v834
        %837 = vrot.lane.b32.xlu0 %v835, 64
        %v838 = vpop.permute.xlu0 %837
        %v840 = vmul.f32 %v822, %v838
        %842 = vrot.lane.b32.xlu0 %v840, 32
        %v843 = vpop.permute.xlu0 %842
        %s845 = scalar_lea.vmem [#allocation3], 16
        %846 = vst.msk [vmem:[%s845] sm:$0xff] %vm532, %v843
        %s847 = scalar_lea.vmem [#allocation2], 24
        %v848 = vld [vmem:[%s847] sm:$0xff]
        %v849 = vsel %vm532, %v843, 0
        %851 = vmatprep.subr.mxu0 0.0
        %852 = vmatpush1.msra.mxu0 %v525
        %853 = vmatprep.subr.mxu0 0.0
        %854 = vmatpush1.msra.mxu0 %v526
        %855 = vmatprep.subr.mxu0 0.0
        %856 = vmatpush1.msra.mxu0 %v527
        %857 = vmatprep.subr.mxu0 0.0
        %858 = vmatpush1.msra.mxu0 %v528
        %859 = vmatprep.subr.mxu0 0.0
        %860 = vmatpush1.msra.mxu0 0.0
        %861 = vmatprep.subr.mxu0 0.0
        %862 = vmatpush1.msra.mxu0 0.0
        %863 = vmatprep.subr.mxu0 0.0
        %864 = vmatpush1.msra.mxu0 0.0
        %865 = vmatprep.subr.mxu0 0.0
        %866 = vmatpush1.msra.mxu0 0.0
        %867 = vmatprep.subr.mxu0 0.0
        %868 = vmatpush1.msra.mxu0 0.0
        %869 = vmatprep.subr.mxu0 0.0
        %870 = vmatpush1.msra.mxu0 0.0
        %871 = vmatprep.subr.mxu0 0.0
        %872 = vmatpush1.msra.mxu0 0.0
        %873 = vmatprep.subr.mxu0 0.0
        %874 = vmatpush1.msra.mxu0 0.0
        %875 = vmatprep.subr.mxu0 0.0
        %876 = vmatpush1.msra.mxu0 0.0
        %877 = vmatprep.subr.mxu0 0.0
        %878 = vmatpush1.msra.mxu0 0.0
        %879 = vmatprep.subr.mxu0 0.0
        %880 = vmatpush1.msra.mxu0 0.0
        %881 = vmatprep.subr.mxu0 0.0
        %882 = vmatpush1.msra.mxu0 0.0
        %883 = vmatprep.subr.mxu0 0.0
        %884 = vmatpush1.msra.mxu0 0.0
        %885 = vmatprep.subr.mxu0 0.0
        %886 = vmatpush1.msra.mxu0 0.0
        %887 = vmatprep.subr.mxu0 0.0
        %888 = vmatpush1.msra.mxu0 0.0
        %889 = vmatprep.subr.mxu0 0.0
        %890 = vmatpush1.msra.mxu0 0.0
        %891 = vmatprep.subr.mxu0 0.0
        %892 = vmatpush1.msra.mxu0 0.0
        %893 = vmatprep.subr.mxu0 0.0
        %894 = vmatpush1.msra.mxu0 0.0
        %895 = vmatprep.subr.mxu0 0.0
        %896 = vmatpush1.msra.mxu0 0.0
        %897 = vmatprep.subr.mxu0 0.0
        %898 = vmatpush1.msra.mxu0 0.0
        %899 = vmatprep.subr.mxu0 0.0
        %900 = vmatpush1.msra.mxu0 0.0
        %901 = vmatprep.subr.mxu0 0.0
        %902 = vmatpush1.msra.mxu0 0.0
        %903 = vmatprep.subr.mxu0 0.0
        %904 = vmatpush1.msra.mxu0 0.0
        %905 = vmatprep.subr.mxu0 0.0
        %906 = vmatpush1.msra.mxu0 0.0
        %907 = vmatprep.subr.mxu0 0.0
        %908 = vmatpush1.msra.mxu0 0.0
        %909 = vmatprep.subr.mxu0 0.0
        %910 = vmatpush1.msra.mxu0 0.0
        %911 = vmatprep.subr.mxu0 0.0
        %912 = vmatpush1.msra.mxu0 0.0
        %913 = vmatprep.subr.mxu0 0.0
        %914 = vmatpush1.msra.mxu0 0.0
        %915 = vmatprep.mubr.f32.mxu0 0.0
        %916 = vmatmul.mubr.f32.gmra.mrb[0].mxu0 %v849
        %v917 = vpop.f32.mrb[0].mxu0
        %v918 = vadd.f32 %v848, %v917
        %v919 = vpop.f32.mrb[0].mxu0
        %920 = vdwg.mxu0
        %v921 = vxor.u32 %v918, 2147483648
        %v922 = vmul.f32 %v921, 1.442695
        %v923 = vpow.pop %v922
        %v924 = vadd.f32 %v923, 1.0
        %v925 = vrcp.pop %v924
        %v926 = vmul.f32 1.0, %v925
        %v927 = vtanh.pop %v918
        %v928 = vmul.f32 %v926, %v834
        %930 = vrot.lane.b32.xlu0 %v927, 64
        %v931 = vpop.permute.xlu0 %930
        %v933 = vmul.f32 %v926, %v931
        %935 = vrot.lane.b32.xlu0 %v933, 32
        %v936 = vpop.permute.xlu0 %935
        %v938 = vadd.f32 %v928, %v936
        %v939 = vtanh.pop %v938
        %941 = vrot.lane.b32.xlu0 %v939, 64
        %v942 = vpop.permute.xlu0 %941
        %v944 = vmul.f32 %v926, %v942
        %946 = vrot.lane.b32.xlu0 %v944, 32
        %v947 = vpop.permute.xlu0 %946
        %s949 = scalar_lea.vmem [#allocation3], 24
        %950 = vst.msk [vmem:[%s949] sm:$0xff] %vm532, %v947
        %s951 = scalar_lea.vmem [#allocation2], 32
        %v952 = vld [vmem:[%s951] sm:$0xff]
        %v953 = vsel %vm532, %v947, 0
        %955 = vmatprep.subr.mxu0 0.0
        %956 = vmatpush1.msra.mxu0 %v525
        %957 = vmatprep.subr.mxu0 0.0
        %958 = vmatpush1.msra.mxu0 %v526
        %959 = vmatprep.subr.mxu0 0.0
        %960 = vmatpush1.msra.mxu0 %v527
        %961 = vmatprep.subr.mxu0 0.0
        %962 = vmatpush1.msra.mxu0 %v528
        %963 = vmatprep.subr.mxu0 0.0
        %964 = vmatpush1.msra.mxu0 0.0
        %965 = vmatprep.subr.mxu0 0.0
        %966 = vmatpush1.msra.mxu0 0.0
        %967 = vmatprep.subr.mxu0 0.0
        %968 = vmatpush1.msra.mxu0 0.0
        %969 = vmatprep.subr.mxu0 0.0
        %970 = vmatpush1.msra.mxu0 0.0
        %971 = vmatprep.subr.mxu0 0.0
        %972 = vmatpush1.msra.mxu0 0.0
        %973 = vmatprep.subr.mxu0 0.0
        %974 = vmatpush1.msra.mxu0 0.0
        %975 = vmatprep.subr.mxu0 0.0
        %976 = vmatpush1.msra.mxu0 0.0
        %977 = vmatprep.subr.mxu0 0.0
        %978 = vmatpush1.msra.mxu0 0.0
        %979 = vmatprep.subr.mxu0 0.0
        %980 = vmatpush1.msra.mxu0 0.0
        %981 = vmatprep.subr.mxu0 0.0
        %982 = vmatpush1.msra.mxu0 0.0
        %983 = vmatprep.subr.mxu0 0.0
        %984 = vmatpush1.msra.mxu0 0.0
        %985 = vmatprep.subr.mxu0 0.0
        %986 = vmatpush1.msra.mxu0 0.0
        %987 = vmatprep.subr.mxu0 0.0
        %988 = vmatpush1.msra.mxu0 0.0
        %989 = vmatprep.subr.mxu0 0.0
        %990 = vmatpush1.msra.mxu0 0.0
        %991 = vmatprep.subr.mxu0 0.0
        %992 = vmatpush1.msra.mxu0 0.0
        %993 = vmatprep.subr.mxu0 0.0
        %994 = vmatpush1.msra.mxu0 0.0
        %995 = vmatprep.subr.mxu0 0.0
        %996 = vmatpush1.msra.mxu0 0.0
        %997 = vmatprep.subr.mxu0 0.0
        %998 = vmatpush1.msra.mxu0 0.0
        %999 = vmatprep.subr.mxu0 0.0
        %1000 = vmatpush1.msra.mxu0 0.0
        %1001 = vmatprep.subr.mxu0 0.0
        %1002 = vmatpush1.msra.mxu0 0.0
        %1003 = vmatprep.subr.mxu0 0.0
        %1004 = vmatpush1.msra.mxu0 0.0
        %1005 = vmatprep.subr.mxu0 0.0
        %1006 = vmatpush1.msra.mxu0 0.0
        %1007 = vmatprep.subr.mxu0 0.0
        %1008 = vmatpush1.msra.mxu0 0.0
        %1009 = vmatprep.subr.mxu0 0.0
        %1010 = vmatpush1.msra.mxu0 0.0
        %1011 = vmatprep.subr.mxu0 0.0
        %1012 = vmatpush1.msra.mxu0 0.0
        %1013 = vmatprep.subr.mxu0 0.0
        %1014 = vmatpush1.msra.mxu0 0.0
        %1015 = vmatprep.subr.mxu0 0.0
        %1016 = vmatpush1.msra.mxu0 0.0
        %1017 = vmatprep.subr.mxu0 0.0
        %1018 = vmatpush1.msra.mxu0 0.0
        %1019 = vmatprep.mubr.f32.mxu0 0.0
        %1020 = vmatmul.mubr.f32.gmra.mrb[0].mxu0 %v953
        %v1021 = vpop.f32.mrb[0].mxu0
        %v1022 = vadd.f32 %v952, %v1021
        %v1023 = vpop.f32.mrb[0].mxu0
        %1024 = vdwg.mxu0
        %v1025 = vxor.u32 %v1022, 2147483648
        %v1026 = vmul.f32 %v1025, 1.442695
        %v1027 = vpow.pop %v1026
        %v1028 = vadd.f32 %v1027, 1.0
        %v1029 = vrcp.pop %v1028
        %v1030 = vmul.f32 1.0, %v1029
        %v1031 = vtanh.pop %v1022
        %v1032 = vmul.f32 %v1030, %v938
        %1034 = vrot.lane.b32.xlu0 %v1031, 64
        %v1035 = vpop.permute.xlu0 %1034
        %v1037 = vmul.f32 %v1030, %v1035
        %1039 = vrot.lane.b32.xlu0 %v1037, 32
        %v1040 = vpop.permute.xlu0 %1039
        %v1042 = vadd.f32 %v1032, %v1040
        %v1043 = vtanh.pop %v1042
        %1045 = vrot.lane.b32.xlu0 %v1043, 64
        %v1046 = vpop.permute.xlu0 %1045
        %v1048 = vmul.f32 %v1030, %v1046
        %1050 = vrot.lane.b32.xlu0 %v1048, 32
        %v1051 = vpop.permute.xlu0 %1050
        %s1053 = scalar_lea.vmem [#allocation3], 32
        %1054 = vst.msk [vmem:[%s1053] sm:$0xff] %vm532, %v1051
        %s1055 = scalar_lea.vmem [#allocation2], 40
        %v1056 = vld [vmem:[%s1055] sm:$0xff]
        %v1057 = vsel %vm532, %v1051, 0
        %1059 = vmatprep.subr.mxu0 0.0
        %1060 = vmatpush1.msra.mxu0 %v525
        %1061 = vmatprep.subr.mxu0 0.0
        %1062 = vmatpush1.msra.mxu0 %v526
        %1063 = vmatprep.subr.mxu0 0.0
        %1064 = vmatpush1.msra.mxu0 %v527
        %1065 = vmatprep.subr.mxu0 0.0
        %1066 = vmatpush1.msra.mxu0 %v528
        %1067 = vmatprep.subr.mxu0 0.0
        %1068 = vmatpush1.msra.mxu0 0.0
        %1069 = vmatprep.subr.mxu0 0.0
        %1070 = vmatpush1.msra.mxu0 0.0
        %1071 = vmatprep.subr.mxu0 0.0
        %1072 = vmatpush1.msra.mxu0 0.0
        %1073 = vmatprep.subr.mxu0 0.0
        %1074 = vmatpush1.msra.mxu0 0.0
        %1075 = vmatprep.subr.mxu0 0.0
        %1076 = vmatpush1.msra.mxu0 0.0
        %1077 = vmatprep.subr.mxu0 0.0
        %1078 = vmatpush1.msra.mxu0 0.0
        %1079 = vmatprep.subr.mxu0 0.0
        %1080 = vmatpush1.msra.mxu0 0.0
        %1081 = vmatprep.subr.mxu0 0.0
        %1082 = vmatpush1.msra.mxu0 0.0
        %1083 = vmatprep.subr.mxu0 0.0
        %1084 = vmatpush1.msra.mxu0 0.0
        %1085 = vmatprep.subr.mxu0 0.0
        %1086 = vmatpush1.msra.mxu0 0.0
        %1087 = vmatprep.subr.mxu0 0.0
        %1088 = vmatpush1.msra.mxu0 0.0
        %1089 = vmatprep.subr.mxu0 0.0
        %1090 = vmatpush1.msra.mxu0 0.0
        %1091 = vmatprep.subr.mxu0 0.0
        %1092 = vmatpush1.msra.mxu0 0.0
        %1093 = vmatprep.subr.mxu0 0.0
        %1094 = vmatpush1.msra.mxu0 0.0
        %1095 = vmatprep.subr.mxu0 0.0
        %1096 = vmatpush1.msra.mxu0 0.0
        %1097 = vmatprep.subr.mxu0 0.0
        %1098 = vmatpush1.msra.mxu0 0.0
        %1099 = vmatprep.subr.mxu0 0.0
        %1100 = vmatpush1.msra.mxu0 0.0
        %1101 = vmatprep.subr.mxu0 0.0
        %1102 = vmatpush1.msra.mxu0 0.0
        %1103 = vmatprep.subr.mxu0 0.0
        %1104 = vmatpush1.msra.mxu0 0.0
        %1105 = vmatprep.subr.mxu0 0.0
        %1106 = vmatpush1.msra.mxu0 0.0
        %1107 = vmatprep.subr.mxu0 0.0
        %1108 = vmatpush1.msra.mxu0 0.0
        %1109 = vmatprep.subr.mxu0 0.0
        %1110 = vmatpush1.msra.mxu0 0.0
        %1111 = vmatprep.subr.mxu0 0.0
        %1112 = vmatpush1.msra.mxu0 0.0
        %1113 = vmatprep.subr.mxu0 0.0
        %1114 = vmatpush1.msra.mxu0 0.0
        %1115 = vmatprep.subr.mxu0 0.0
        %1116 = vmatpush1.msra.mxu0 0.0
        %1117 = vmatprep.subr.mxu0 0.0
        %1118 = vmatpush1.msra.mxu0 0.0
        %1119 = vmatprep.subr.mxu0 0.0
        %1120 = vmatpush1.msra.mxu0 0.0
        %1121 = vmatprep.subr.mxu0 0.0
        %1122 = vmatpush1.msra.mxu0 0.0
        %1123 = vmatprep.mubr.f32.mxu0 0.0
        %1124 = vmatmul.mubr.f32.gmra.mrb[0].mxu0 %v1057
        %v1125 = vpop.f32.mrb[0].mxu0
        %v1126 = vadd.f32 %v1056, %v1125
        %v1127 = vpop.f32.mrb[0].mxu0
        %1128 = vdwg.mxu0
        %v1129 = vxor.u32 %v1126, 2147483648
        %v1130 = vmul.f32 %v1129, 1.442695
        %v1131 = vpow.pop %v1130
        %v1132 = vadd.f32 %v1131, 1.0
        %v1133 = vrcp.pop %v1132
        %v1134 = vmul.f32 1.0, %v1133
        %v1135 = vtanh.pop %v1126
        %v1136 = vmul.f32 %v1134, %v1042
        %1138 = vrot.lane.b32.xlu0 %v1135, 64
        %v1139 = vpop.permute.xlu0 %1138
        %v1141 = vmul.f32 %v1134, %v1139
        %1143 = vrot.lane.b32.xlu0 %v1141, 32
        %v1144 = vpop.permute.xlu0 %1143
        %v1146 = vadd.f32 %v1136, %v1144
        %v1147 = vtanh.pop %v1146
        %1149 = vrot.lane.b32.xlu0 %v1147, 64
        %v1150 = vpop.permute.xlu0 %1149
        %v1152 = vmul.f32 %v1134, %v1150
        %1154 = vrot.lane.b32.xlu0 %v1152, 32
        %v1155 = vpop.permute.xlu0 %1154
        %s1157 = scalar_lea.vmem [#allocation3], 40
        %1158 = vst.msk [vmem:[%s1157] sm:$0xff] %vm532, %v1155
        %s1159 = scalar_lea.vmem [#allocation2], 48
        %v1160 = vld [vmem:[%s1159] sm:$0xff]
        %v1161 = vsel %vm532, %v1155, 0
        %1163 = vmatprep.subr.mxu0 0.0
        %1164 = vmatpush1.msra.mxu0 %v525
        %1165 = vmatprep.subr.mxu0 0.0
        %1166 = vmatpush1.msra.mxu0 %v526
        %1167 = vmatprep.subr.mxu0 0.0
        %1168 = vmatpush1.msra.mxu0 %v527
        %1169 = vmatprep.subr.mxu0 0.0
        %1170 = vmatpush1.msra.mxu0 %v528
        %1171 = vmatprep.subr.mxu0 0.0
        %1172 = vmatpush1.msra.mxu0 0.0
        %1173 = vmatprep.subr.mxu0 0.0
        %1174 = vmatpush1.msra.mxu0 0.0
        %1175 = vmatprep.subr.mxu0 0.0
        %1176 = vmatpush1.msra.mxu0 0.0
        %1177 = vmatprep.subr.mxu0 0.0
        %1178 = vmatpush1.msra.mxu0 0.0
        %1179 = vmatprep.subr.mxu0 0.0
        %1180 = vmatpush1.msra.mxu0 0.0
        %1181 = vmatprep.subr.mxu0 0.0
        %1182 = vmatpush1.msra.mxu0 0.0
        %1183 = vmatprep.subr.mxu0 0.0
        %1184 = vmatpush1.msra.mxu0 0.0
        %1185 = vmatprep.subr.mxu0 0.0
        %1186 = vmatpush1.msra.mxu0 0.0
        %1187 = vmatprep.subr.mxu0 0.0
        %1188 = vmatpush1.msra.mxu0 0.0
        %1189 = vmatprep.subr.mxu0 0.0
        %1190 = vmatpush1.msra.mxu0 0.0
        %1191 = vmatprep.subr.mxu0 0.0
        %1192 = vmatpush1.msra.mxu0 0.0
        %1193 = vmatprep.subr.mxu0 0.0
        %1194 = vmatpush1.msra.mxu0 0.0
        %1195 = vmatprep.subr.mxu0 0.0
        %1196 = vmatpush1.msra.mxu0 0.0
        %1197 = vmatprep.subr.mxu0 0.0
        %1198 = vmatpush1.msra.mxu0 0.0
        %1199 = vmatprep.subr.mxu0 0.0
        %1200 = vmatpush1.msra.mxu0 0.0
        %1201 = vmatprep.subr.mxu0 0.0
        %1202 = vmatpush1.msra.mxu0 0.0
        %1203 = vmatprep.subr.mxu0 0.0
        %1204 = vmatpush1.msra.mxu0 0.0
        %1205 = vmatprep.subr.mxu0 0.0
        %1206 = vmatpush1.msra.mxu0 0.0
        %1207 = vmatprep.subr.mxu0 0.0
        %1208 = vmatpush1.msra.mxu0 0.0
        %1209 = vmatprep.subr.mxu0 0.0
        %1210 = vmatpush1.msra.mxu0 0.0
        %1211 = vmatprep.subr.mxu0 0.0
        %1212 = vmatpush1.msra.mxu0 0.0
        %1213 = vmatprep.subr.mxu0 0.0
        %1214 = vmatpush1.msra.mxu0 0.0
        %1215 = vmatprep.subr.mxu0 0.0
        %1216 = vmatpush1.msra.mxu0 0.0
        %1217 = vmatprep.subr.mxu0 0.0
        %1218 = vmatpush1.msra.mxu0 0.0
        %1219 = vmatprep.subr.mxu0 0.0
        %1220 = vmatpush1.msra.mxu0 0.0
        %1221 = vmatprep.subr.mxu0 0.0
        %1222 = vmatpush1.msra.mxu0 0.0
        %1223 = vmatprep.subr.mxu0 0.0
        %1224 = vmatpush1.msra.mxu0 0.0
        %1225 = vmatprep.subr.mxu0 0.0
        %1226 = vmatpush1.msra.mxu0 0.0
        %1227 = vmatprep.mubr.f32.mxu0 0.0
        %1228 = vmatmul.mubr.f32.gmra.mrb[0].mxu0 %v1161
        %v1229 = vpop.f32.mrb[0].mxu0
        %v1230 = vadd.f32 %v1160, %v1229
        %v1231 = vpop.f32.mrb[0].mxu0
        %1232 = vdwg.mxu0
        %v1233 = vxor.u32 %v1230, 2147483648
        %v1234 = vmul.f32 %v1233, 1.442695
        %v1235 = vpow.pop %v1234
        %v1236 = vadd.f32 %v1235, 1.0
        %v1237 = vrcp.pop %v1236
        %v1238 = vmul.f32 1.0, %v1237
        %v1239 = vtanh.pop %v1230
        %v1240 = vmul.f32 %v1238, %v1146
        %1242 = vrot.lane.b32.xlu0 %v1239, 64
        %v1243 = vpop.permute.xlu0 %1242
        %v1245 = vmul.f32 %v1238, %v1243
        %1247 = vrot.lane.b32.xlu0 %v1245, 32
        %v1248 = vpop.permute.xlu0 %1247
        %v1250 = vadd.f32 %v1240, %v1248
        %v1251 = vtanh.pop %v1250
        %1253 = vrot.lane.b32.xlu0 %v1251, 64
        %v1254 = vpop.permute.xlu0 %1253
        %v1256 = vmul.f32 %v1238, %v1254
        %1258 = vrot.lane.b32.xlu0 %v1256, 32
        %v1259 = vpop.permute.xlu0 %1258
        %s1261 = scalar_lea.vmem [#allocation3], 48
        %1262 = vst.msk [vmem:[%s1261] sm:$0xff] %vm532, %v1259
        %s1263 = scalar_lea.vmem [#allocation2], 56
        %v1264 = vld [vmem:[%s1263] sm:$0xff]
        %v1265 = vsel %vm532, %v1259, 0
        %1267 = vmatprep.subr.mxu0 0.0
        %1268 = vmatpush1.msra.mxu0 %v525
        %1269 = vmatprep.subr.mxu0 0.0
        %1270 = vmatpush1.msra.mxu0 %v526
        %1271 = vmatprep.subr.mxu0 0.0
        %1272 = vmatpush1.msra.mxu0 %v527
        %1273 = vmatprep.subr.mxu0 0.0
        %1274 = vmatpush1.msra.mxu0 %v528
        %1275 = vmatprep.subr.mxu0 0.0
        %1276 = vmatpush1.msra.mxu0 0.0
        %1277 = vmatprep.subr.mxu0 0.0
        %1278 = vmatpush1.msra.mxu0 0.0
        %1279 = vmatprep.subr.mxu0 0.0
        %1280 = vmatpush1.msra.mxu0 0.0
        %1281 = vmatprep.subr.mxu0 0.0
        %1282 = vmatpush1.msra.mxu0 0.0
        %1283 = vmatprep.subr.mxu0 0.0
        %1284 = vmatpush1.msra.mxu0 0.0
        %1285 = vmatprep.subr.mxu0 0.0
        %1286 = vmatpush1.msra.mxu0 0.0
        %1287 = vmatprep.subr.mxu0 0.0
        %1288 = vmatpush1.msra.mxu0 0.0
        %1289 = vmatprep.subr.mxu0 0.0
        %1290 = vmatpush1.msra.mxu0 0.0
        %1291 = vmatprep.subr.mxu0 0.0
        %1292 = vmatpush1.msra.mxu0 0.0
        %1293 = vmatprep.subr.mxu0 0.0
        %1294 = vmatpush1.msra.mxu0 0.0
        %1295 = vmatprep.subr.mxu0 0.0
        %1296 = vmatpush1.msra.mxu0 0.0
        %1297 = vmatprep.subr.mxu0 0.0
        %1298 = vmatpush1.msra.mxu0 0.0
        %1299 = vmatprep.subr.mxu0 0.0
        %1300 = vmatpush1.msra.mxu0 0.0
        %1301 = vmatprep.subr.mxu0 0.0
        %1302 = vmatpush1.msra.mxu0 0.0
        %1303 = vmatprep.subr.mxu0 0.0
        %1304 = vmatpush1.msra.mxu0 0.0
        %1305 = vmatprep.subr.mxu0 0.0
        %1306 = vmatpush1.msra.mxu0 0.0
        %1307 = vmatprep.subr.mxu0 0.0
        %1308 = vmatpush1.msra.mxu0 0.0
        %1309 = vmatprep.subr.mxu0 0.0
        %1310 = vmatpush1.msra.mxu0 0.0
        %1311 = vmatprep.subr.mxu0 0.0
        %1312 = vmatpush1.msra.mxu0 0.0
        %1313 = vmatprep.subr.mxu0 0.0
        %1314 = vmatpush1.msra.mxu0 0.0
        %1315 = vmatprep.subr.mxu0 0.0
        %1316 = vmatpush1.msra.mxu0 0.0
        %1317 = vmatprep.subr.mxu0 0.0
        %1318 = vmatpush1.msra.mxu0 0.0
        %1319 = vmatprep.subr.mxu0 0.0
        %1320 = vmatpush1.msra.mxu0 0.0
        %1321 = vmatprep.subr.mxu0 0.0
        %1322 = vmatpush1.msra.mxu0 0.0
        %1323 = vmatprep.subr.mxu0 0.0
        %1324 = vmatpush1.msra.mxu0 0.0
        %1325 = vmatprep.subr.mxu0 0.0
        %1326 = vmatpush1.msra.mxu0 0.0
        %1327 = vmatprep.subr.mxu0 0.0
        %1328 = vmatpush1.msra.mxu0 0.0
        %1329 = vmatprep.subr.mxu0 0.0
        %1330 = vmatpush1.msra.mxu0 0.0
        %1331 = vmatprep.mubr.f32.mxu0 0.0
        %1332 = vmatmul.mubr.f32.gmra.mrb[0].mxu0 %v1265
        %v1333 = vpop.f32.mrb[0].mxu0
        %v1334 = vadd.f32 %v1264, %v1333
        %v1335 = vpop.f32.mrb[0].mxu0
        %1336 = vdwg.mxu0
        %v1337 = vxor.u32 %v1334, 2147483648
        %v1338 = vmul.f32 %v1337, 1.442695
        %v1339 = vpow.pop %v1338
        %v1340 = vadd.f32 %v1339, 1.0
        %v1341 = vrcp.pop %v1340
        %v1342 = vmul.f32 1.0, %v1341
        %v1343 = vtanh.pop %v1334
        %v1344 = vmul.f32 %v1342, %v1250
        %1346 = vrot.lane.b32.xlu0 %v1343, 64
        %v1347 = vpop.permute.xlu0 %1346
        %v1349 = vmul.f32 %v1342, %v1347
        %1351 = vrot.lane.b32.xlu0 %v1349, 32
        %v1352 = vpop.permute.xlu0 %1351
        %v1354 = vadd.f32 %v1344, %v1352
        %v1355 = vtanh.pop %v1354
        %1357 = vrot.lane.b32.xlu0 %v1355, 64
        %v1358 = vpop.permute.xlu0 %1357
        %v1360 = vmul.f32 %v1342, %v1358
        %1362 = vrot.lane.b32.xlu0 %v1360, 32
        %v1363 = vpop.permute.xlu0 %1362
        %s1365 = scalar_lea.vmem [#allocation3], 56
        %1366 = vst.msk [vmem:[%s1365] sm:$0xff] %vm532, %v1363
        %1367 = vst.msk [vmem:[%s364] sm:$0xff] %vm532, %v1363
        %1369 = vrot.lane.b32.xlu0 %v1354, 96
        %v1370 = vpop.permute.xlu0 %1369
        %1372 = vst.msk [vmem:[%s371] sm:$0xff] %vm532, %v1370
        %v1373 = vld [vmem:[#allocation10 + $0x38] sm:$0xff]
        %v1374 = vld [vmem:[#allocation10 + $0x40] sm:$0xff]
        %v1375 = vld [vmem:[#allocation10 + $0x48] sm:$0xff]
        %v1376 = vld [vmem:[#allocation10 + $0x50] sm:$0xff]
        %v1377 = vld [vmem:[#allocation10 + $0x58] sm:$0x1]
        %v1378 = vld [vmem:[#allocation3] sm:$0xff]
        %v1379 = vld [vmem:[#allocation3 + $0x8] sm:$0xff]
        %v1380 = vld [vmem:[#allocation3 + $0x10] sm:$0xff]
        %v1381 = vld [vmem:[#allocation3 + $0x18] sm:$0xff]
        %v1382 = vld [vmem:[#allocation3 + $0x20] sm:$0xff]
        %v1383 = vld [vmem:[#allocation3 + $0x28] sm:$0xff]
        %v1384 = vld [vmem:[#allocation3 + $0x30] sm:$0xff]
        %v1385 = vld [vmem:[#allocation3 + $0x38] sm:$0xff]
        %v1386 = vlaneseq
        %v1387 = vshrl.u32 %v1386, 7
        %v1388 = vsub.s32 0, %v1387
        %v1389 = vrot.slane %v1377, %v1388
        %v1391 = vsel %vm532, %v1378, 0
        %v1394 = vsel %vm532, %v1379, 0
        %v1397 = vsel %vm532, %v1380, 0
        %v1400 = vsel %vm532, %v1381, 0
        %v1403 = vsel %vm532, %v1382, 0
        %v1406 = vsel %vm532, %v1383, 0
        %v1409 = vsel %vm532, %v1384, 0
        %v1412 = vsel %vm532, %v1385, 0
        %1414 = vmatprep.subr.mxu0 0.0
        %1415 = vmatpush1.msra.mxu0 %v1373
        %1416 = vmatprep.subr.mxu0 0.0
        %1417 = vmatpush1.msra.mxu0 %v1374
        %1418 = vmatprep.subr.mxu0 0.0
        %1419 = vmatpush1.msra.mxu0 %v1375
        %1420 = vmatprep.subr.mxu0 0.0
        %1421 = vmatpush1.msra.mxu0 %v1376
        %1422 = vmatprep.subr.mxu0 0.0
        %1423 = vmatpush1.msra.mxu0 0.0
        %1424 = vmatprep.subr.mxu0 0.0
        %1425 = vmatpush1.msra.mxu0 0.0
        %1426 = vmatprep.subr.mxu0 0.0
        %1427 = vmatpush1.msra.mxu0 0.0
        %1428 = vmatprep.subr.mxu0 0.0
        %1429 = vmatpush1.msra.mxu0 0.0
        %1430 = vmatprep.subr.mxu0 0.0
        %1431 = vmatpush1.msra.mxu0 0.0
        %1432 = vmatprep.subr.mxu0 0.0
        %1433 = vmatpush1.msra.mxu0 0.0
        %1434 = vmatprep.subr.mxu0 0.0
        %1435 = vmatpush1.msra.mxu0 0.0
        %1436 = vmatprep.subr.mxu0 0.0
        %1437 = vmatpush1.msra.mxu0 0.0
        %1438 = vmatprep.subr.mxu0 0.0
        %1439 = vmatpush1.msra.mxu0 0.0
        %1440 = vmatprep.subr.mxu0 0.0
        %1441 = vmatpush1.msra.mxu0 0.0
        %1442 = vmatprep.subr.mxu0 0.0
        %1443 = vmatpush1.msra.mxu0 0.0
        %1444 = vmatprep.subr.mxu0 0.0
        %1445 = vmatpush1.msra.mxu0 0.0
        %1446 = vmatprep.subr.mxu0 0.0
        %1447 = vmatpush1.msra.mxu0 0.0
        %1448 = vmatprep.subr.mxu0 0.0
        %1449 = vmatpush1.msra.mxu0 0.0
        %1450 = vmatprep.subr.mxu0 0.0
        %1451 = vmatpush1.msra.mxu0 0.0
        %1452 = vmatprep.subr.mxu0 0.0
        %1453 = vmatpush1.msra.mxu0 0.0
        %1454 = vmatprep.subr.mxu0 0.0
        %1455 = vmatpush1.msra.mxu0 0.0
        %1456 = vmatprep.subr.mxu0 0.0
        %1457 = vmatpush1.msra.mxu0 0.0
        %1458 = vmatprep.subr.mxu0 0.0
        %1459 = vmatpush1.msra.mxu0 0.0
        %1460 = vmatprep.subr.mxu0 0.0
        %1461 = vmatpush1.msra.mxu0 0.0
        %1462 = vmatprep.subr.mxu0 0.0
        %1463 = vmatpush1.msra.mxu0 0.0
        %1464 = vmatprep.subr.mxu0 0.0
        %1465 = vmatpush1.msra.mxu0 0.0
        %1466 = vmatprep.subr.mxu0 0.0
        %1467 = vmatpush1.msra.mxu0 0.0
        %1468 = vmatprep.subr.mxu0 0.0
        %1469 = vmatpush1.msra.mxu0 0.0
        %1470 = vmatprep.subr.mxu0 0.0
        %1471 = vmatpush1.msra.mxu0 0.0
        %1472 = vmatprep.subr.mxu0 0.0
        %1473 = vmatpush1.msra.mxu0 0.0
        %1474 = vmatprep.subr.mxu0 0.0
        %1475 = vmatpush1.msra.mxu0 0.0
        %1476 = vmatprep.subr.mxu0 0.0
        %1477 = vmatpush1.msra.mxu0 0.0
        %1478 = vmatprep.mubr.f32.mxu0 0.0
        %1479 = vmatmul.mubr.f32.gmra.mrb[0].mxu0 %v1391
        %v1480 = vpop.f32.mrb[0].mxu0
        %v1481 = vadd.f32 %v1389, %v1480
        %v1482 = vpop.f32.mrb[0].mxu0
        %1483 = vmatprep.mubr.f32.mxu0 0.0
        %1484 = vmatmul.mubr.f32.gmra.mrb[0].mxu0 %v1394
        %v1485 = vpop.f32.mrb[0].mxu0
        %v1486 = vadd.f32 %v1389, %v1485
        %v1487 = vpop.f32.mrb[0].mxu0
        %1488 = vmatprep.mubr.f32.mxu0 0.0
        %1489 = vmatmul.mubr.f32.gmra.mrb[0].mxu0 %v1397
        %v1490 = vpop.f32.mrb[0].mxu0
        %v1491 = vadd.f32 %v1389, %v1490
        %v1492 = vpop.f32.mrb[0].mxu0
        %1493 = vmatprep.mubr.f32.mxu0 0.0
        %1494 = vmatmul.mubr.f32.gmra.mrb[0].mxu0 %v1400
        %v1495 = vpop.f32.mrb[0].mxu0
        %v1496 = vadd.f32 %v1389, %v1495
        %v1497 = vpop.f32.mrb[0].mxu0
        %1498 = vmatprep.mubr.f32.mxu0 0.0
        %1499 = vmatmul.mubr.f32.gmra.mrb[0].mxu0 %v1403
        %v1500 = vpop.f32.mrb[0].mxu0
        %v1501 = vadd.f32 %v1389, %v1500
        %v1502 = vpop.f32.mrb[0].mxu0
        %1503 = vmatprep.mubr.f32.mxu0 0.0
        %1504 = vmatmul.mubr.f32.gmra.mrb[0].mxu0 %v1406
        %v1505 = vpop.f32.mrb[0].mxu0
        %v1506 = vadd.f32 %v1389, %v1505
        %v1507 = vpop.f32.mrb[0].mxu0
        %1508 = vmatprep.mubr.f32.mxu0 0.0
        %1509 = vmatmul.mubr.f32.gmra.mrb[0].mxu0 %v1409
        %v1510 = vpop.f32.mrb[0].mxu0
        %v1511 = vadd.f32 %v1389, %v1510
        %v1512 = vpop.f32.mrb[0].mxu0
        %1513 = vmatprep.mubr.f32.mxu0 0.0
        %1514 = vmatmul.mubr.f32.gmra.mrb[0].mxu0 %v1412
        %v1515 = vpop.f32.mrb[0].mxu0
        %v1516 = vadd.f32 %v1389, %v1515
        %v1517 = vpop.f32.mrb[0].mxu0
        %1518 = vdwg.mxu0
        %1519 = vst [vmem:[%s357] sm:$0xff] %v1481
        %1520 = vst [vmem:[%s357 + $0x8] sm:$0xff] %v1486
        %1521 = vst [vmem:[%s357 + $0x10] sm:$0xff] %v1491
        %1522 = vst [vmem:[%s357 + $0x18] sm:$0xff] %v1496
        %1523 = vst [vmem:[%s357 + $0x20] sm:$0xff] %v1501
        %1524 = vst [vmem:[%s357 + $0x28] sm:$0xff] %v1506
        %1525 = vst [vmem:[%s357 + $0x30] sm:$0xff] %v1511
        %1526 = vst [vmem:[%s357 + $0x38] sm:$0xff] %v1516
        %s1527 = sand.u32 %s138, 1
        %s1528 = sand.u32 %s138, 1
        %s1529 = smul.addr %s1528, 64
        %s1530 = scalar_lea.vmem [#allocation12], %s1529
        %s1531 = sand.u32 %s164, 1
        %s1532 = scalar_lea.sflag [#allocation6], %s1531
        %s1533 = sand.u32 %s164, 1
        %s1534 = smul.addr %s1533, 8
        %s1535 = scalar_lea.vmem [#allocation13], %s1534
        %s1536 = sand.u32 %s190, 1
        %s1537 = scalar_lea.sflag [#allocation15], %s1536
        %s1538 = sand.u32 %s190, 1
        %s1539 = smul.addr %s1538, 8
        %s1540 = scalar_lea.vmem [#allocation14], %s1539
        // Predicated region
        $region53: #{lstm_agent_rollout.1} parent=35 // pred_check
          %p1541 = pneg %p148
        $region54: #{lstm_agent_rollout.1} parent=35 // pred_check_branch
          %1543 = sbr.rel (%p1541) target = $region56
        $region55: #{lstm_agent_rollout.1} parent=35 // pred_region
          %s1544 = smul.addr %s31, 8
          %s1545 = scalar_lea.vmem %s4, %s1544
          // Predicated region
          $region57: #{lstm_agent_rollout.1} parent=55 // pred_check
            _
          $region58: #{lstm_agent_rollout.1} parent=55 // pred_check_branch
            %1547 = sbr.rel (0) target = $region60
          $region59: #{lstm_agent_rollout.1} parent=55 // pred_region
            // Predicated region
            $region61: #{lstm_agent_rollout.1} parent=59 // pred_check
              _
            $region62: #{lstm_agent_rollout.1} parent=59 // pred_check_branch
              %1549 = sbr.rel (0) target = $region64
            $region63: #{lstm_agent_rollout.1} parent=59 // pred_region
              // Predicated region
              $region76: #{lstm_agent_rollout.1} parent=63 // pred_check
                _
              $region77: #{lstm_agent_rollout.1} parent=63 // pred_check_branch
                %1578 = sbr.rel (0) target = $region79
              $region78: #{lstm_agent_rollout.1} parent=63 // pred_region
                loop: start=0, step=1, limit=1
                $region80: #{lstm_agent_rollout.1} parent=78 // loop_pre_header
                  _
                $region81: #{lstm_agent_rollout.1} parent=78 // loop_header
                  %s1580 = sphi 0, %s1584
                  %p1581 = scmp.ge.s32.totalorder %s1580, 1
                  %s1585 = sphi %s1530, %s1530
                  %s1586 = sphi %s1545, %s1545
                $region82: #{lstm_agent_rollout.1} parent=78 // loop_header_branch
                  %1583 = sbr.rel (%p1581) target = $region86
                $region83: #{lstm_agent_rollout.1} parent=78 // loop_body
                  %v1587 = vld [vmem:[%s1585] sm:$0xff]
                  %1588 = vst [vmem:[%s1586] sm:$0xff] %v1587
                  %v1589 = vld [vmem:[%s1585 + $0x8] sm:$0xff]
                  %1590 = vst [vmem:[%s1586 + $0x10] sm:$0xff] %v1589
                  %v1591 = vld [vmem:[%s1585 + $0x10] sm:$0xff]
                  %1592 = vst [vmem:[%s1586 + $0x20] sm:$0xff] %v1591
                  %v1593 = vld [vmem:[%s1585 + $0x18] sm:$0xff]
                  %1594 = vst [vmem:[%s1586 + $0x30] sm:$0xff] %v1593
                  %v1595 = vld [vmem:[%s1585 + $0x20] sm:$0xff]
                  %1596 = vst [vmem:[%s1586 + $0x40] sm:$0xff] %v1595
                  %v1597 = vld [vmem:[%s1585 + $0x28] sm:$0xff]
                  %1598 = vst [vmem:[%s1586 + $0x50] sm:$0xff] %v1597
                  %v1599 = vld [vmem:[%s1585 + $0x30] sm:$0xff]
                  %1600 = vst [vmem:[%s1586 + $0x60] sm:$0xff] %v1599
                  %v1601 = vld [vmem:[%s1585 + $0x38] sm:$0xff]
                  %1602 = vst [vmem:[%s1586 + $0x70] sm:$0xff] %v1601
                $region84: #{lstm_agent_rollout.1} parent=78 // loop_footer
                  %s1584 = sadd.s32 1, %s1580
                $region85: #{lstm_agent_rollout.1} parent=78 // loop_footer_branch
                  %1579 = sbr.rel target = $region81
                $region86: #{lstm_agent_rollout.1} parent=78 // loop_exit
                  _
              $region79: #{lstm_agent_rollout.1} parent=63 // pred_fallthru
                _
              // Predicated region
              $region87: #{lstm_agent_rollout.1} parent=63 // pred_check
                _
              $region88: #{lstm_agent_rollout.1} parent=63 // pred_check_branch
                %1604 = sbr.rel target = $region90
              $region89: #{lstm_agent_rollout.1} parent=63 // pred_region
                _
              $region90: #{lstm_agent_rollout.1} parent=63 // pred_fallthru
                _
            $region64: #{lstm_agent_rollout.1} parent=59 // pred_fallthru
              _
            // Predicated region
            $region65: #{lstm_agent_rollout.1} parent=59 // pred_check
              _
            $region66: #{lstm_agent_rollout.1} parent=59 // pred_check_branch
              %1551 = sbr.rel target = $region68
            $region67: #{lstm_agent_rollout.1} parent=59 // pred_region
              loop: start=0, step=1, limit=1
              $region69: #{lstm_agent_rollout.1} parent=67 // loop_pre_header
                _
              $region70: #{lstm_agent_rollout.1} parent=67 // loop_header
                %s1554 = sphi 0, %s1558
                %p1555 = scmp.ge.s32.totalorder %s1554, 1
                %s1559 = sphi %s1530, %s1530
                %s1560 = sphi %s1545, %s1545
              $region71: #{lstm_agent_rollout.1} parent=67 // loop_header_branch
                %1557 = sbr.rel (%p1555) target = $region75
              $region72: #{lstm_agent_rollout.1} parent=67 // loop_body
                %v1561 = vld [vmem:[%s1559] sm:$0xff]
                %1562 = vst [vmem:[%s1560] sm:$0xff] %v1561
                %v1563 = vld [vmem:[%s1559 + $0x8] sm:$0xff]
                %1564 = vst [vmem:[%s1560 + $0x10] sm:$0xff] %v1563
                %v1565 = vld [vmem:[%s1559 + $0x10] sm:$0xff]
                %1566 = vst [vmem:[%s1560 + $0x20] sm:$0xff] %v1565
                %v1567 = vld [vmem:[%s1559 + $0x18] sm:$0xff]
                %1568 = vst [vmem:[%s1560 + $0x30] sm:$0xff] %v1567
                %v1569 = vld [vmem:[%s1559 + $0x20] sm:$0xff]
                %1570 = vst [vmem:[%s1560 + $0x40] sm:$0xff] %v1569
                %v1571 = vld [vmem:[%s1559 + $0x28] sm:$0xff]
                %1572 = vst [vmem:[%s1560 + $0x50] sm:$0xff] %v1571
                %v1573 = vld [vmem:[%s1559 + $0x30] sm:$0xff]
                %1574 = vst [vmem:[%s1560 + $0x60] sm:$0xff] %v1573
                %v1575 = vld [vmem:[%s1559 + $0x38] sm:$0xff]
                %1576 = vst [vmem:[%s1560 + $0x70] sm:$0xff] %v1575
              $region73: #{lstm_agent_rollout.1} parent=67 // loop_footer
                %s1558 = sadd.s32 1, %s1554
              $region74: #{lstm_agent_rollout.1} parent=67 // loop_footer_branch
                %1553 = sbr.rel target = $region70
              $region75: #{lstm_agent_rollout.1} parent=67 // loop_exit
                _
            $region68: #{lstm_agent_rollout.1} parent=59 // pred_fallthru
              _
          $region60: #{lstm_agent_rollout.1} parent=55 // pred_fallthru
            _
          %1605 = vnop
        $region56: #{lstm_agent_rollout.1} parent=35 // pred_fallthru
          _
        // Predicated region
        $region91: #{lstm_agent_rollout.1} parent=35 // pred_check
          %p1606 = pneg %p174
        $region92: #{lstm_agent_rollout.1} parent=35 // pred_check_branch
          %1608 = sbr.rel (%p1606) target = $region94
        $region93: #{lstm_agent_rollout.1} parent=35 // pred_region
          %s1610 = ssub.s32 128, 128
          %1611 = vsyncadd %s1532, %s1610
          %s1612 = smul.addr %s31, 128
          %s1613 = scalar_lea.hbm %s5, %s1612
          %s1615 = sshll.u32 %s1535, 4
          %s1616 = int_to_ptr.vmem [resolvable:$true] %s1615
          %1618 = dma.vmem_to_hbm [thread:$0]  %s1616, 128, %s1613, %s1532
        $region94: #{lstm_agent_rollout.1} parent=35 // pred_fallthru
          _
        // Predicated region
        $region95: #{lstm_agent_rollout.1} parent=35 // pred_check
          %p1619 = pneg %p200
        $region96: #{lstm_agent_rollout.1} parent=35 // pred_check_branch
          %1621 = sbr.rel (%p1619) target = $region98
        $region97: #{lstm_agent_rollout.1} parent=35 // pred_region
          %s1623 = ssub.s32 128, 128
          %1624 = vsyncadd %s1537, %s1623
          %s1625 = smul.addr %s31, 128
          %s1626 = scalar_lea.hbm %s6, %s1625
          %s1628 = sshll.u32 %s1540, 4
          %s1629 = int_to_ptr.vmem [resolvable:$true] %s1628
          %1631 = dma.vmem_to_hbm [thread:$0]  %s1629, 128, %s1626, %s1537
        $region98: #{lstm_agent_rollout.1} parent=35 // pred_fallthru
          _
      $region36: #{lstm_agent_rollout.1} parent=5 // pred_fallthru
        _
      %p1632 = scmp.le.s32.totalorder 2, %s26
      // Predicated region
      $region99: #{lstm_agent_rollout.1} parent=5 // pred_check
        %p1633 = pneg %p1632
      $region100: #{lstm_agent_rollout.1} parent=5 // pred_check_branch
        %1635 = sbr.rel (%p1633) target = $region102
      $region101: #{lstm_agent_rollout.1} parent=5 // pred_region
        %s1636 = ssub.s32 %s26, 2
        // Predicated region
        $region103: #{lstm_agent_rollout.1} parent=101 // pred_check
          %p1637 = pneg %p154
        $region104: #{lstm_agent_rollout.1} parent=101 // pred_check_branch
          %1639 = sbr.rel (%p1637) target = $region106
        $region105: #{lstm_agent_rollout.1} parent=101 // pred_region
          %s1640 = sand.u32 %s139, 1
          %s1641 = sand.u32 %s139, 1
          %s1642 = smul.addr %s1641, 64
          %s1643 = scalar_lea.vmem [#allocation12], %s1642
        $region106: #{lstm_agent_rollout.1} parent=101 // pred_fallthru
          _
        // Predicated region
        $region107: #{lstm_agent_rollout.1} parent=101 // pred_check
          %p1644 = pneg %p180
        $region108: #{lstm_agent_rollout.1} parent=101 // pred_check_branch
          %1646 = sbr.rel (%p1644) target = $region110
        $region109: #{lstm_agent_rollout.1} parent=101 // pred_region
          %s1647 = sand.u32 %s165, 1
          %s1648 = scalar_lea.sflag [#allocation6], %s1647
          %s1649 = sand.u32 %s165, 1
          %s1650 = smul.addr %s1649, 8
          %s1651 = scalar_lea.vmem [#allocation13], %s1650
          %1652 = dma.done %s1648, 128
        $region110: #{lstm_agent_rollout.1} parent=101 // pred_fallthru
          _
        // Predicated region
        $region111: #{lstm_agent_rollout.1} parent=101 // pred_check
          %p1653 = pneg %p206
        $region112: #{lstm_agent_rollout.1} parent=101 // pred_check_branch
          %1655 = sbr.rel (%p1653) target = $region114
        $region113: #{lstm_agent_rollout.1} parent=101 // pred_region
          %s1656 = sand.u32 %s191, 1
          %s1657 = scalar_lea.sflag [#allocation15], %s1656
          %s1658 = sand.u32 %s191, 1
          %s1659 = smul.addr %s1658, 8
          %s1660 = scalar_lea.vmem [#allocation14], %s1659
          %1661 = dma.done %s1657, 128
        $region114: #{lstm_agent_rollout.1} parent=101 // pred_fallthru
          _
      $region102: #{lstm_agent_rollout.1} parent=5 // pred_fallthru
        _
    $region6: #{lstm_agent_rollout.1} parent=1 // loop_footer
      %s30 = sadd.s32 1, %s26
    $region7: #{lstm_agent_rollout.1} parent=1 // loop_footer_branch
      %25 = sbr.rel target = $region3
    $region8: #{lstm_agent_rollout.1} parent=1 // loop_exit
      _
    %1662 = vsyncpa [#allocation5], 1
    %s1663 = scalar_lea.sflag [#allocation5], 1
    %1664 = vsyncpa %s1663, 1
    %1665 = vsyncpa [#allocation8], 1
    %s1666 = scalar_lea.sflag [#allocation8], 1
    %1667 = vsyncpa %s1666, 1
    %1668 = vsyncpa [#allocation11], 1
    %1669 = vsyncpa [#allocation6], 1
    %s1670 = scalar_lea.sflag [#allocation6], 1
    %1671 = vsyncpa %s1670, 1
    %1672 = vsyncpa [#allocation15], 1
    %s1673 = scalar_lea.sflag [#allocation15], 1
    %1674 = vsyncpa %s1673, 1

</llo_original>
